<compile_context>
chip_gen: v7x
topology: tpu7x:2x2x1
jax: 0.10.0
libtpu: 0.0.40
codegen_flags: <defaults>
</compile_context>

<pallas_src>
import functools

import numpy as np
import jax
import jax.numpy as jnp
from jax.experimental import pallas as pl
from jax.experimental.pallas import tpu as pltpu


def stgcn_block_kernel(x_ref, a_ref, wg_ref, wt_ref, b_ref, o_ref, *, T, V, Kt, pad):
    C, TV = x_ref.shape
    x = x_ref[...].astype(jnp.float32)            # (C, T*V) one sample, lane-dense

    bg = b_ref[:, 0:1]       # gcn 1x1-conv bias (BN1 scale pre-folded)
    b1 = b_ref[:, 1:2]       # BN1 shift
    b2 = b_ref[:, 2:3]       # BN2 shift (+ folded temporal-conv bias)

    # --- GCN: 1x1 conv over channels (BN1 scale folded into wg rows) + bias ---
    y = jnp.dot(wg_ref[...], x, preferred_element_type=jnp.float32) + bg

    # --- graph contraction via the lane-period trick ---
    # a_ref = kron(I_{128//V}, A); each 128-lane chunk of y holds 128//V whole
    # frames, so chunk @ a_ref == per-frame einsum('...v,vw->...w', ., A).
    z_parts = []
    for j in range(TV // 128):                    # static unroll, tile-aligned slices
        yj = y[:, j * 128:(j + 1) * 128]
        z_parts.append(jnp.dot(yj, a_ref[...], preferred_element_type=jnp.float32))
    z = jnp.concatenate(z_parts, axis=1) if len(z_parts) > 1 else z_parts[0]

    # --- BN1 shift + ReLU ---
    h = jnp.maximum(z + b1, 0.0)

    # --- temporal conv (Kt, 1), stride 1, 'same' zero padding ---
    # Accumulate Kt small (C,C)x(C,TV) matmuls.  Frame shifts use pltpu.roll
    # (XLU) + a boundary mask; the circularly wrapped frames are exactly the
    # ones the mask zeroes, so this equals zero padding at the sample edges.
    lane = jax.lax.broadcasted_iota(jnp.int32, (C, TV), 1)
    acc = jnp.zeros((C, TV), jnp.float32)
    for k in range(Kt):                           # static unroll
        s = k - pad
        if s == 0:
            hk = h
        else:
            hk = pltpu.roll(h, (-s * V) % TV, axis=1)
            valid = (lane >= (-s) * V) if s < 0 else (lane < (T - s) * V)
            hk = jnp.where(valid, hk, 0.0)
        acc = acc + jnp.dot(wt_ref[k], hk, preferred_element_type=jnp.float32)

    # --- BN2 shift (scale folded into wt) + identity residual + ReLU ---
    o_ref[...] = jnp.maximum(acc + b2 + x, 0.0).astype(o_ref.dtype)


def st_gcn_block(x, A, params):
    """Pallas ST-GCN block. x: (N, C, T, V), A: (V, V). Returns (out, A)."""
    N, C, T, V = x.shape
    (Wg, bg, g1, be1, m1, v1, Wt, bt, g2, be2, m2, v2) = params
    eps = 1e-5
    Kt = Wt.shape[2]
    pad = (Kt - 1) // 2
    TV = T * V

    # Lane-period trick requirements (hold for V=16).
    # TODO(synk): general V (e.g. 25-joint skeletons, 128 % V != 0) needs
    # per-frame grid tiling with A passed as a (V, V) block instead.
    assert 128 % V == 0 and TV % 128 == 0, "lane-period trick needs V|128, 128|T*V"

    # Fold inference-mode BatchNorm: BN1 scale -> gcn conv rows, BN2 scale ->
    # tcn conv rows, tcn bias -> BN2 shift.  Only 3 shift vectors survive.
    s1 = g1 / jnp.sqrt(v1 + eps)
    s2 = g2 / jnp.sqrt(v2 + eps)
    wg_f = Wg * s1[:, None]                                     # (C, C)
    bg_f = bg * s1                                              # (C,)
    b1 = be1 - m1 * s1                                          # (C,)
    wt_f = jnp.transpose(Wt, (2, 0, 1)) * s2[None, :, None]     # (Kt, C, C)
    b2 = be2 - m2 * s2 + s2 * bt                                # (C,)
    b_pack = jnp.stack([bg_f, b1, b2], axis=1)                  # (C, 3), one operand

    # Size-invariant adjacency operand: (128, 128) regardless of N, T.
    a128 = jnp.kron(jnp.eye(128 // V, dtype=A.dtype), A)

    # Per-sample lane-dense blocks (no transpose needed): (N, C, T*V).
    xr = x.reshape(N, C, TV)

    kernel = functools.partial(stgcn_block_kernel, T=T, V=V, Kt=Kt, pad=pad)
    # Grid-invariant operands (weights / adjacency / shifts): constant index_map;
    # total < 150 KiB so buffering depth is irrelevant for VMEM here.
    inv = lambda *blk: pl.BlockSpec(blk, lambda n: (0,) * len(blk))

    out_flat = pl.pallas_call(
        kernel,
        out_shape=jax.ShapeDtypeStruct((N, C, TV), x.dtype),
        grid=(N,),
        in_specs=[
            pl.BlockSpec((None, C, TV), lambda n: (n, 0, 0)),   # x (one sample)
            inv(128, 128),                                      # kron(I_{128//V}, A)
            inv(C, C),                                          # gcn weight (BN1 folded)
            inv(Kt, C, C),                                      # tcn weight (BN2 folded)
            inv(C, 3),                                          # packed per-channel shifts
        ],
        out_specs=pl.BlockSpec((None, C, TV), lambda n: (n, 0, 0)),
        compiler_params=pltpu.CompilerParams(
            dimension_semantics=("parallel",)),                 # split samples across TCs
    )(xr, a128, wg_f, wt_f, b_pack)

    out = out_flat.reshape(N, C, T, V)
    return out, A


def ref_forward(x, A, params):
    """Pure-JAX reference matching the PyTorch forward (inference-mode BN)."""
    (Wg, bg, g1, be1, m1, v1, Wt, bt, g2, be2, m2, v2) = params
    eps = 1e-5
    T = x.shape[2]
    Kt = Wt.shape[2]
    pad = (Kt - 1) // 2

    res = x
    y = jnp.einsum('oc,nctv->notv', Wg, x) + bg[None, :, None, None]
    y = jnp.einsum('nctv,vw->nctw', y, A)
    h = (y - m1[None, :, None, None]) / jnp.sqrt(v1 + eps)[None, :, None, None]
    h = h * g1[None, :, None, None] + be1[None, :, None, None]
    h = jnp.maximum(h, 0.0)
    hp = jnp.pad(h, ((0, 0), (0, 0), (pad, pad), (0, 0)))
    out = jnp.zeros_like(y)
    for k in range(Kt):
        out = out + jnp.einsum('oc,nctv->notv', Wt[:, :, k], hp[:, :, k:k + T, :])
    out = out + bt[None, :, None, None]
    out = (out - m2[None, :, None, None]) / jnp.sqrt(v2 + eps)[None, :, None, None]
    out = out * g2[None, :, None, None] + be2[None, :, None, None]
    out = out + res
    return jnp.maximum(out, 0.0), A


if __name__ == "__main__":
    N, C, T, V, Kt = 2, 8, 16, 16, 9   # in_channels == out_channels, stride=1

    key = jax.random.PRNGKey(0)
    ks = jax.random.split(key, 16)
    x = jax.random.normal(ks[0], (N, C, T, V), jnp.float32)
    A = 0.2 * jax.random.normal(ks[1], (V, V), jnp.float32)

    Wg = 0.1 * jax.random.normal(ks[2], (C, C), jnp.float32)       # gcn 1x1 conv weight
    bg = 0.1 * jax.random.normal(ks[3], (C,), jnp.float32)
    g1 = 1.0 + 0.1 * jax.random.normal(ks[4], (C,), jnp.float32)   # BN1
    be1 = 0.1 * jax.random.normal(ks[5], (C,), jnp.float32)
    m1 = 0.1 * jax.random.normal(ks[6], (C,), jnp.float32)
    v1 = jax.random.uniform(ks[7], (C,), jnp.float32, 0.5, 1.5)
    Wt = 0.05 * jax.random.normal(ks[8], (C, C, Kt), jnp.float32)  # tcn conv (Co,Ci,Kt)
    bt = 0.1 * jax.random.normal(ks[9], (C,), jnp.float32)
    g2 = 1.0 + 0.1 * jax.random.normal(ks[10], (C,), jnp.float32)  # BN2
    be2 = 0.1 * jax.random.normal(ks[11], (C,), jnp.float32)
    m2 = 0.1 * jax.random.normal(ks[12], (C,), jnp.float32)
    v2 = jax.random.uniform(ks[13], (C,), jnp.float32, 0.5, 1.5)

    params = (Wg, bg, g1, be1, m1, v1, Wt, bt, g2, be2, m2, v2)

    out, A_out = st_gcn_block(x, A, params)
    out = jax.block_until_ready(out)

    ref, _ = ref_forward(x, A, params)
    np.testing.assert_allclose(np.asarray(out), np.asarray(ref), rtol=1e-4, atol=1e-4)

    print("KERNEL_OK")
</pallas_src>

<mosaic_0001>
module attributes {stable_mosaic.version = 11 : i64} {
  func.func @stgcn_block_kernel(%arg0: i32, %arg1: memref<1x8x256xf32, #tpu.memory_space<vmem>>, %arg2: memref<128x128xf32, #tpu.memory_space<vmem>>, %arg3: memref<8x8xf32, #tpu.memory_space<vmem>>, %arg4: memref<9x8x8xf32, #tpu.memory_space<vmem>>, %arg5: memref<8x3xf32, #tpu.memory_space<vmem>>, %arg6: memref<1x8x256xf32, #tpu.memory_space<vmem>>) attributes {dimension_semantics = [#tpu.dimension_semantics<parallel>], iteration_bounds = array<i64: 2>, scalar_prefetch = 0 : i64, scratch_operands = 0 : i64, tpu.core_type = #tpu.core_type<tc>, window_params = [{transform_indices = @transform_0, window_bounds = array<i64: 1, 8, 256>}, {pipeline_mode = #tpu.pipeline_mode<synchronous>, transform_indices = @transform_1, window_bounds = array<i64: 128, 128>}, {pipeline_mode = #tpu.pipeline_mode<synchronous>, transform_indices = @transform_2, window_bounds = array<i64: 8, 8>}, {pipeline_mode = #tpu.pipeline_mode<synchronous>, transform_indices = @transform_3, window_bounds = array<i64: 9, 8, 8>}, {pipeline_mode = #tpu.pipeline_mode<synchronous>, transform_indices = @transform_4, window_bounds = array<i64: 8, 3>}, {transform_indices = @transform_5, window_bounds = array<i64: 1, 8, 256>}]} {
    %c0 = arith.constant 0 : index
    %c0_0 = arith.constant 0 : index
    %c0_1 = arith.constant 0 : index
    %0 = vector.load %arg1[%c0, %c0_0, %c0_1] : memref<1x8x256xf32, #tpu.memory_space<vmem>>, vector<1x8x256xf32>
    %1 = vector.shape_cast %0 : vector<1x8x256xf32> to vector<8x256xf32>
    %c0_2 = arith.constant 0 : index
    %c0_3 = arith.constant 0 : index
    %2 = vector.load %arg5[%c0_2, %c0_3] : memref<8x3xf32, #tpu.memory_space<vmem>>, vector<8x1xf32>
    %c0_4 = arith.constant 0 : index
    %c1 = arith.constant 1 : index
    %3 = vector.load %arg5[%c0_4, %c1] : memref<8x3xf32, #tpu.memory_space<vmem>>, vector<8x1xf32>
    %c0_5 = arith.constant 0 : index
    %c2 = arith.constant 2 : index
    %4 = vector.load %arg5[%c0_5, %c2] : memref<8x3xf32, #tpu.memory_space<vmem>>, vector<8x1xf32>
    %c0_6 = arith.constant 0 : index
    %c0_7 = arith.constant 0 : index
    %5 = vector.load %arg3[%c0_6, %c0_7] : memref<8x8xf32, #tpu.memory_space<vmem>>, vector<8x8xf32>
    %cst = arith.constant dense<0.000000e+00> : vector<8x256xf32>
    %6 = tpu.matmul %5, %1, %cst {dimension_numbers = #tpu.dot_dimension_numbers<[1], [0], [0], [1], [0, 0, 1, 1], [], []>} : vector<8x8xf32>, vector<8x256xf32>, vector<8x256xf32> -> vector<8x256xf32>
    %7 = vector.broadcast %2 : vector<8x1xf32> to vector<8x256xf32>
    %8 = arith.addf %6, %7 : vector<8x256xf32>
    %9 = vector.extract_strided_slice %8 {offsets = [0, 0], sizes = [8, 128], strides = [1, 1]} : vector<8x256xf32> to vector<8x128xf32>
    %c0_8 = arith.constant 0 : index
    %c0_9 = arith.constant 0 : index
    %10 = vector.load %arg2[%c0_8, %c0_9] : memref<128x128xf32, #tpu.memory_space<vmem>>, vector<128x128xf32>
    %cst_10 = arith.constant dense<0.000000e+00> : vector<8x128xf32>
    %11 = tpu.matmul %9, %10, %cst_10 {dimension_numbers = #tpu.dot_dimension_numbers<[1], [0], [0], [1], [0, 0, 1, 1], [], []>} : vector<8x128xf32>, vector<128x128xf32>, vector<8x128xf32> -> vector<8x128xf32>
    %12 = vector.extract_strided_slice %8 {offsets = [0, 128], sizes = [8, 128], strides = [1, 1]} : vector<8x256xf32> to vector<8x128xf32>
    %c0_11 = arith.constant 0 : index
    %c0_12 = arith.constant 0 : index
    %13 = vector.load %arg2[%c0_11, %c0_12] : memref<128x128xf32, #tpu.memory_space<vmem>>, vector<128x128xf32>
    %cst_13 = arith.constant dense<0.000000e+00> : vector<8x128xf32>
    %14 = tpu.matmul %12, %13, %cst_13 {dimension_numbers = #tpu.dot_dimension_numbers<[1], [0], [0], [1], [0, 0, 1, 1], [], []>} : vector<8x128xf32>, vector<128x128xf32>, vector<8x128xf32> -> vector<8x128xf32>
    %15 = tpu.concatenate %11, %14 in 1 : vector<8x128xf32>, vector<8x128xf32> -> vector<8x256xf32>
    %16 = vector.broadcast %3 : vector<8x1xf32> to vector<8x256xf32>
    %17 = arith.addf %15, %16 : vector<8x256xf32>
    %cst_14 = arith.constant 0.000000e+00 : f32
    %18 = vector.broadcast %cst_14 : f32 to vector<8x256xf32>
    %19 = arith.maximumf %17, %18 : vector<8x256xf32>
    %20 = tpu.iota {dimensions = array<i32: 1>} : vector<8x256xi32>
    %cst_15 = arith.constant 0.000000e+00 : f32
    %21 = vector.broadcast %cst_15 : f32 to vector<8x256xf32>
    %c64_i32 = arith.constant 64 : i32
    %22 = tpu.dynamic_rotate %19 by %c64_i32 dim 1 : vector<8x256xf32>, i32 -> vector<8x256xf32>
    %c64_i32_16 = arith.constant 64 : i32
    %23 = vector.broadcast %c64_i32_16 : i32 to vector<8x256xi32>
    %24 = arith.cmpi sge, %20, %23 : vector<8x256xi32>
    %cst_17 = arith.constant 0.000000e+00 : f32
    %25 = vector.broadcast %cst_17 : f32 to vector<8x256xf32>
    %26 = arith.select %24, %22, %25 : vector<8x256xi1>, vector<8x256xf32>
    %c0_18 = arith.constant 0 : index
    %c0_19 = arith.constant 0 : index
    %c0_20 = arith.constant 0 : index
    %27 = vector.load %arg4[%c0_18, %c0_19, %c0_20] : memref<9x8x8xf32, #tpu.memory_space<vmem>>, vector<1x8x8xf32>
    %28 = vector.shape_cast %27 : vector<1x8x8xf32> to vector<8x8xf32>
    %cst_21 = arith.constant dense<0.000000e+00> : vector<8x256xf32>
    %29 = tpu.matmul %28, %26, %cst_21 {dimension_numbers = #tpu.dot_dimension_numbers<[1], [0], [0], [1], [0, 0, 1, 1], [], []>} : vector<8x8xf32>, vector<8x256xf32>, vector<8x256xf32> -> vector<8x256xf32>
    %30 = arith.addf %21, %29 : vector<8x256xf32>
    %c48_i32 = arith.constant 48 : i32
    %31 = tpu.dynamic_rotate %19 by %c48_i32 dim 1 : vector<8x256xf32>, i32 -> vector<8x256xf32>
    %c48_i32_22 = arith.constant 48 : i32
    %32 = vector.broadcast %c48_i32_22 : i32 to vector<8x256xi32>
    %33 = arith.cmpi sge, %20, %32 : vector<8x256xi32>
    %cst_23 = arith.constant 0.000000e+00 : f32
    %34 = vector.broadcast %cst_23 : f32 to vector<8x256xf32>
    %35 = arith.select %33, %31, %34 : vector<8x256xi1>, vector<8x256xf32>
    %c1_24 = arith.constant 1 : index
    %c0_25 = arith.constant 0 : index
    %c0_26 = arith.constant 0 : index
    %36 = vector.load %arg4[%c1_24, %c0_25, %c0_26] : memref<9x8x8xf32, #tpu.memory_space<vmem>>, vector<1x8x8xf32>
    %37 = vector.shape_cast %36 : vector<1x8x8xf32> to vector<8x8xf32>
    %cst_27 = arith.constant dense<0.000000e+00> : vector<8x256xf32>
    %38 = tpu.matmul %37, %35, %cst_27 {dimension_numbers = #tpu.dot_dimension_numbers<[1], [0], [0], [1], [0, 0, 1, 1], [], []>} : vector<8x8xf32>, vector<8x256xf32>, vector<8x256xf32> -> vector<8x256xf32>
    %39 = arith.addf %30, %38 : vector<8x256xf32>
    %c32_i32 = arith.constant 32 : i32
    %40 = tpu.dynamic_rotate %19 by %c32_i32 dim 1 : vector<8x256xf32>, i32 -> vector<8x256xf32>
    %c32_i32_28 = arith.constant 32 : i32
    %41 = vector.broadcast %c32_i32_28 : i32 to vector<8x256xi32>
    %42 = arith.cmpi sge, %20, %41 : vector<8x256xi32>
    %cst_29 = arith.constant 0.000000e+00 : f32
    %43 = vector.broadcast %cst_29 : f32 to vector<8x256xf32>
    %44 = arith.select %42, %40, %43 : vector<8x256xi1>, vector<8x256xf32>
    %c2_30 = arith.constant 2 : index
    %c0_31 = arith.constant 0 : index
    %c0_32 = arith.constant 0 : index
    %45 = vector.load %arg4[%c2_30, %c0_31, %c0_32] : memref<9x8x8xf32, #tpu.memory_space<vmem>>, vector<1x8x8xf32>
    %46 = vector.shape_cast %45 : vector<1x8x8xf32> to vector<8x8xf32>
    %cst_33 = arith.constant dense<0.000000e+00> : vector<8x256xf32>
    %47 = tpu.matmul %46, %44, %cst_33 {dimension_numbers = #tpu.dot_dimension_numbers<[1], [0], [0], [1], [0, 0, 1, 1], [], []>} : vector<8x8xf32>, vector<8x256xf32>, vector<8x256xf32> -> vector<8x256xf32>
    %48 = arith.addf %39, %47 : vector<8x256xf32>
    %c16_i32 = arith.constant 16 : i32
    %49 = tpu.dynamic_rotate %19 by %c16_i32 dim 1 : vector<8x256xf32>, i32 -> vector<8x256xf32>
    %c16_i32_34 = arith.constant 16 : i32
    %50 = vector.broadcast %c16_i32_34 : i32 to vector<8x256xi32>
    %51 = arith.cmpi sge, %20, %50 : vector<8x256xi32>
    %cst_35 = arith.constant 0.000000e+00 : f32
    %52 = vector.broadcast %cst_35 : f32 to vector<8x256xf32>
    %53 = arith.select %51, %49, %52 : vector<8x256xi1>, vector<8x256xf32>
    %c3 = arith.constant 3 : index
    %c0_36 = arith.constant 0 : index
    %c0_37 = arith.constant 0 : index
    %54 = vector.load %arg4[%c3, %c0_36, %c0_37] : memref<9x8x8xf32, #tpu.memory_space<vmem>>, vector<1x8x8xf32>
    %55 = vector.shape_cast %54 : vector<1x8x8xf32> to vector<8x8xf32>
    %cst_38 = arith.constant dense<0.000000e+00> : vector<8x256xf32>
    %56 = tpu.matmul %55, %53, %cst_38 {dimension_numbers = #tpu.dot_dimension_numbers<[1], [0], [0], [1], [0, 0, 1, 1], [], []>} : vector<8x8xf32>, vector<8x256xf32>, vector<8x256xf32> -> vector<8x256xf32>
    %57 = arith.addf %48, %56 : vector<8x256xf32>
    %c4 = arith.constant 4 : index
    %c0_39 = arith.constant 0 : index
    %c0_40 = arith.constant 0 : index
    %58 = vector.load %arg4[%c4, %c0_39, %c0_40] : memref<9x8x8xf32, #tpu.memory_space<vmem>>, vector<1x8x8xf32>
    %59 = vector.shape_cast %58 : vector<1x8x8xf32> to vector<8x8xf32>
    %cst_41 = arith.constant dense<0.000000e+00> : vector<8x256xf32>
    %60 = tpu.matmul %59, %19, %cst_41 {dimension_numbers = #tpu.dot_dimension_numbers<[1], [0], [0], [1], [0, 0, 1, 1], [], []>} : vector<8x8xf32>, vector<8x256xf32>, vector<8x256xf32> -> vector<8x256xf32>
    %61 = arith.addf %57, %60 : vector<8x256xf32>
    %c240_i32 = arith.constant 240 : i32
    %62 = tpu.dynamic_rotate %19 by %c240_i32 dim 1 : vector<8x256xf32>, i32 -> vector<8x256xf32>
    %c240_i32_42 = arith.constant 240 : i32
    %63 = vector.broadcast %c240_i32_42 : i32 to vector<8x256xi32>
    %64 = arith.cmpi slt, %20, %63 : vector<8x256xi32>
    %cst_43 = arith.constant 0.000000e+00 : f32
    %65 = vector.broadcast %cst_43 : f32 to vector<8x256xf32>
    %66 = arith.select %64, %62, %65 : vector<8x256xi1>, vector<8x256xf32>
    %c5 = arith.constant 5 : index
    %c0_44 = arith.constant 0 : index
    %c0_45 = arith.constant 0 : index
    %67 = vector.load %arg4[%c5, %c0_44, %c0_45] : memref<9x8x8xf32, #tpu.memory_space<vmem>>, vector<1x8x8xf32>
    %68 = vector.shape_cast %67 : vector<1x8x8xf32> to vector<8x8xf32>
    %cst_46 = arith.constant dense<0.000000e+00> : vector<8x256xf32>
    %69 = tpu.matmul %68, %66, %cst_46 {dimension_numbers = #tpu.dot_dimension_numbers<[1], [0], [0], [1], [0, 0, 1, 1], [], []>} : vector<8x8xf32>, vector<8x256xf32>, vector<8x256xf32> -> vector<8x256xf32>
    %70 = arith.addf %61, %69 : vector<8x256xf32>
    %c224_i32 = arith.constant 224 : i32
    %71 = tpu.dynamic_rotate %19 by %c224_i32 dim 1 : vector<8x256xf32>, i32 -> vector<8x256xf32>
    %c224_i32_47 = arith.constant 224 : i32
    %72 = vector.broadcast %c224_i32_47 : i32 to vector<8x256xi32>
    %73 = arith.cmpi slt, %20, %72 : vector<8x256xi32>
    %cst_48 = arith.constant 0.000000e+00 : f32
    %74 = vector.broadcast %cst_48 : f32 to vector<8x256xf32>
    %75 = arith.select %73, %71, %74 : vector<8x256xi1>, vector<8x256xf32>
    %c6 = arith.constant 6 : index
    %c0_49 = arith.constant 0 : index
    %c0_50 = arith.constant 0 : index
    %76 = vector.load %arg4[%c6, %c0_49, %c0_50] : memref<9x8x8xf32, #tpu.memory_space<vmem>>, vector<1x8x8xf32>
    %77 = vector.shape_cast %76 : vector<1x8x8xf32> to vector<8x8xf32>
    %cst_51 = arith.constant dense<0.000000e+00> : vector<8x256xf32>
    %78 = tpu.matmul %77, %75, %cst_51 {dimension_numbers = #tpu.dot_dimension_numbers<[1], [0], [0], [1], [0, 0, 1, 1], [], []>} : vector<8x8xf32>, vector<8x256xf32>, vector<8x256xf32> -> vector<8x256xf32>
    %79 = arith.addf %70, %78 : vector<8x256xf32>
    %c208_i32 = arith.constant 208 : i32
    %80 = tpu.dynamic_rotate %19 by %c208_i32 dim 1 : vector<8x256xf32>, i32 -> vector<8x256xf32>
    %c208_i32_52 = arith.constant 208 : i32
    %81 = vector.broadcast %c208_i32_52 : i32 to vector<8x256xi32>
    %82 = arith.cmpi slt, %20, %81 : vector<8x256xi32>
    %cst_53 = arith.constant 0.000000e+00 : f32
    %83 = vector.broadcast %cst_53 : f32 to vector<8x256xf32>
    %84 = arith.select %82, %80, %83 : vector<8x256xi1>, vector<8x256xf32>
    %c7 = arith.constant 7 : index
    %c0_54 = arith.constant 0 : index
    %c0_55 = arith.constant 0 : index
    %85 = vector.load %arg4[%c7, %c0_54, %c0_55] : memref<9x8x8xf32, #tpu.memory_space<vmem>>, vector<1x8x8xf32>
    %86 = vector.shape_cast %85 : vector<1x8x8xf32> to vector<8x8xf32>
    %cst_56 = arith.constant dense<0.000000e+00> : vector<8x256xf32>
    %87 = tpu.matmul %86, %84, %cst_56 {dimension_numbers = #tpu.dot_dimension_numbers<[1], [0], [0], [1], [0, 0, 1, 1], [], []>} : vector<8x8xf32>, vector<8x256xf32>, vector<8x256xf32> -> vector<8x256xf32>
    %88 = arith.addf %79, %87 : vector<8x256xf32>
    %c192_i32 = arith.constant 192 : i32
    %89 = tpu.dynamic_rotate %19 by %c192_i32 dim 1 : vector<8x256xf32>, i32 -> vector<8x256xf32>
    %c192_i32_57 = arith.constant 192 : i32
    %90 = vector.broadcast %c192_i32_57 : i32 to vector<8x256xi32>
    %91 = arith.cmpi slt, %20, %90 : vector<8x256xi32>
    %cst_58 = arith.constant 0.000000e+00 : f32
    %92 = vector.broadcast %cst_58 : f32 to vector<8x256xf32>
    %93 = arith.select %91, %89, %92 : vector<8x256xi1>, vector<8x256xf32>
    %c8 = arith.constant 8 : index
    %c0_59 = arith.constant 0 : index
    %c0_60 = arith.constant 0 : index
    %94 = vector.load %arg4[%c8, %c0_59, %c0_60] : memref<9x8x8xf32, #tpu.memory_space<vmem>>, vector<1x8x8xf32>
    %95 = vector.shape_cast %94 : vector<1x8x8xf32> to vector<8x8xf32>
    %cst_61 = arith.constant dense<0.000000e+00> : vector<8x256xf32>
    %96 = tpu.matmul %95, %93, %cst_61 {dimension_numbers = #tpu.dot_dimension_numbers<[1], [0], [0], [1], [0, 0, 1, 1], [], []>} : vector<8x8xf32>, vector<8x256xf32>, vector<8x256xf32> -> vector<8x256xf32>
    %97 = arith.addf %88, %96 : vector<8x256xf32>
    %98 = vector.broadcast %4 : vector<8x1xf32> to vector<8x256xf32>
    %99 = arith.addf %97, %98 : vector<8x256xf32>
    %100 = arith.addf %99, %1 : vector<8x256xf32>
    %cst_62 = arith.constant 0.000000e+00 : f32
    %101 = vector.broadcast %cst_62 : f32 to vector<8x256xf32>
    %102 = arith.maximumf %100, %101 : vector<8x256xf32>
    %c0_63 = arith.constant 0 : index
    %c0_64 = arith.constant 0 : index
    %c0_65 = arith.constant 0 : index
    %103 = vector.load %arg6[%c0_63, %c0_64, %c0_65] : memref<1x8x256xf32, #tpu.memory_space<vmem>>, vector<1x8x256xf32>
    %104 = vector.shape_cast %103 : vector<1x8x256xf32> to vector<8x256xf32>
    %105 = vector.shape_cast %102 : vector<8x256xf32> to vector<1x8x256xf32>
    tpu.vector_store %arg6[%c0_63, %c0_64, %c0_65], %105 {strides = array<i32>} : memref<1x8x256xf32, #tpu.memory_space<vmem>>, vector<1x8x256xf32>,
    return
  }
  func.func @transform_0(%arg0: i32) -> (i32, i32, i32) {
    %c0_i32 = arith.constant 0 : i32
    %c0_i32_0 = arith.constant 0 : i32
    %c0_i32_1 = arith.constant 0 : i32
    return %arg0, %c0_i32, %c0_i32_0 : i32, i32, i32
  }
  func.func @transform_1(%arg0: i32) -> (i32, i32) {
    %c0_i32 = arith.constant 0 : i32
    %c0_i32_0 = arith.constant 0 : i32
    %c0_i32_1 = arith.constant 0 : i32
    return %c0_i32, %c0_i32_0 : i32, i32
  }
  func.func @transform_2(%arg0: i32) -> (i32, i32) {
    %c0_i32 = arith.constant 0 : i32
    %c0_i32_0 = arith.constant 0 : i32
    %c0_i32_1 = arith.constant 0 : i32
    return %c0_i32, %c0_i32_0 : i32, i32
  }
  func.func @transform_3(%arg0: i32) -> (i32, i32, i32) {
    %c0_i32 = arith.constant 0 : i32
    %c0_i32_0 = arith.constant 0 : i32
    %c0_i32_1 = arith.constant 0 : i32
    %c0_i32_2 = arith.constant 0 : i32
    return %c0_i32, %c0_i32_0, %c0_i32_1 : i32, i32, i32
  }
  func.func @transform_4(%arg0: i32) -> (i32, i32) {
    %c0_i32 = arith.constant 0 : i32
    %c0_i32_0 = arith.constant 0 : i32
    %c0_i32_1 = arith.constant 0 : i32
    return %c0_i32, %c0_i32_0 : i32, i32
  }
  func.func @transform_5(%arg0: i32) -> (i32, i32, i32) {
    %c0_i32 = arith.constant 0 : i32
    %c0_i32_0 = arith.constant 0 : i32
    %c0_i32_1 = arith.constant 0 : i32
    return %arg0, %c0_i32, %c0_i32_0 : i32, i32, i32
  }
}

</mosaic_0001>

<llo_original>
// kernel: tpu_custom_call.1
$region0: #{tpu_custom_call.1}
  #allocation0 [shape = 'u32[]', space=smem, size = 0x4, offset = 0x4, fixed_abs, tag = 'smem constant byte address 0x4 - core index']
  #allocation1 [shape = 'u32[144,128]{1,0:T(1,128)}', space=vmem, size = 0x12000, scoped, tag = 'internal scratch']
  %s0 = inlined_call_operand.hbm [shape: f32[2,8,256], index: 0, kind: input, shape index: {}]
  %s1 = inlined_call_operand.vmem [shape: f32[128,128], index: 1, kind: input, shape index: {}]
  %s2 = inlined_call_operand.vmem [shape: f32[8,8], index: 2, kind: input, shape index: {}]
  %s3 = inlined_call_operand.vmem [shape: f32[9,8,8], index: 3, kind: input, shape index: {}]
  %s4 = inlined_call_operand.vmem [shape: f32[8,3], index: 4, kind: input, shape index: {}]
  %s5 = inlined_call_operand.hbm [shape: f32[2,8,256], index: 5, kind: output, shape index: {}]
  %s6 = sld [smem:[#allocation0]]
  $region57: #{tpu_custom_call.1} parent=0
    _
  %s8 = ssub.s32 1, %s6
  %s9 = scalar_select 0, %s8, %s6
  $region1: #{tpu_custom_call.1} parent=0
    #allocation2 [shape = 'u8[16384]{0}', space=vmem, size = 0x4000, scoped, tag = 'input window, operand 0']
    #allocation3 [shape = 's32[2]{0}', space=sflag, size = 0x8, scoped, tag = 'scoped memory for tpu_custom_call.1']
    #allocation4 [shape = 's32[2]{0}', space=sflag, size = 0x8, scoped, tag = 'scoped memory for tpu_custom_call.1']
    #allocation5 [shape = 'u8[16384]{0}', space=vmem, size = 0x4000, scoped, tag = 'output window, operand 0']
    %10 = vsyncpa [#allocation3], 0
    %s11 = scalar_lea.sflag [#allocation3], 1
    %12 = vsyncpa %s11, 0
    %13 = vsyncpa [#allocation4], 0
    %s14 = scalar_lea.sflag [#allocation4], 1
    %15 = vsyncpa %s14, 0
    loop: start=0, step=1, limit=4
    $region2: #{tpu_custom_call.1} parent=1 // loop_pre_header
      _
    $region3: #{tpu_custom_call.1} parent=1 // loop_header
      %s17 = sphi 0, %s21
      %p18 = scmp.ge.s32.totalorder %s17, 4
      %s27 = sphi 0, %s29
      %s30 = sphi 0, %s27
      %s31 = sphi 0, %s30
      %s47 = sphi 0, %s31
      %s51 = sphi 0, %s51
      %s53 = sphi 0, %s51
      %s54 = sphi 0, %s53
      %s68 = sphi 0, %s54
      %s72 = sphi 0, %s72
      %s74 = sphi 0, %s72
      %s75 = sphi 0, %s74
      %s89 = sphi 0, %s75
      %s93 = sphi 0, %s93
      %s95 = sphi 0, %s93
      %s96 = sphi 0, %s95
      %s110 = sphi 0, %s96
      %s114 = sphi 0, %s114
      %s116 = sphi 0, %s114
      %s117 = sphi 0, %s116
      %s131 = sphi 0, %s117
      %s137 = sphi 0, %s139
      %s140 = sphi 0, %s137
      %s141 = sphi 0, %s140
      %s157 = sphi 0, %s141
    $region4: #{tpu_custom_call.1} parent=1 // loop_header_branch
      %20 = sbr.rel (%p18) target = $region8
    $region5: #{tpu_custom_call.1} parent=1 // loop_body
      %s22 = ssub.s32 %s17, 1
      %s23 = ssub.s32 %s17, 2
      %s24 = sadd.s32 %s17, 1
      %s25 = ssub.s32 %s17, %s24
      %p26 = scmp.eq.s32.totalorder %s25, 0
      %s28 = sadd.s32 %s27, 1
      %s29 = scalar_select %p26, %s27, %s28
      %p32 = pneg %p26
      %p33 = scmp.eq.s32.totalorder %s17, 1
      %p34 = por %p32, %p33
      %p35 = scmp.ne.s32.totalorder %s27, %s30
      %p36 = scmp.eq.s32.totalorder %s17, 0
      %p37 = por %p35, %p36
      %p38 = scmp.ne.s32.totalorder %s27, %s30
      %p39 = scmp.eq.s32.totalorder %s22, 1
      %p40 = por %p38, %p39
      %p41 = scmp.ne.s32.totalorder %s30, %s31
      %p42 = scmp.eq.s32.totalorder %s22, 0
      %p43 = por %p41, %p42
      %p44 = scmp.ne.s32.totalorder %s30, %s31
      %p45 = scmp.eq.s32.totalorder %s23, 1
      %p46 = por %p44, %p45
      %p48 = scmp.ne.s32.totalorder %s31, %s47
      %p49 = scmp.eq.s32.totalorder %s23, 0
      %p50 = por %p48, %p49
      %s52 = sadd.s32 %s51, 1
      %p55 = scmp.eq.s32.totalorder %s17, 1
      %p56 = scmp.ne.s32.totalorder %s51, %s53
      %p57 = scmp.eq.s32.totalorder %s17, 0
      %p58 = por %p56, %p57
      %p59 = scmp.ne.s32.totalorder %s51, %s53
      %p60 = scmp.eq.s32.totalorder %s22, 1
      %p61 = por %p59, %p60
      %p62 = scmp.ne.s32.totalorder %s53, %s54
      %p63 = scmp.eq.s32.totalorder %s22, 0
      %p64 = por %p62, %p63
      %p65 = scmp.ne.s32.totalorder %s53, %s54
      %p66 = scmp.eq.s32.totalorder %s23, 1
      %p67 = por %p65, %p66
      %p69 = scmp.ne.s32.totalorder %s54, %s68
      %p70 = scmp.eq.s32.totalorder %s23, 0
      %p71 = por %p69, %p70
      %s73 = sadd.s32 %s72, 1
      %p76 = scmp.eq.s32.totalorder %s17, 1
      %p77 = scmp.ne.s32.totalorder %s72, %s74
      %p78 = scmp.eq.s32.totalorder %s17, 0
      %p79 = por %p77, %p78
      %p80 = scmp.ne.s32.totalorder %s72, %s74
      %p81 = scmp.eq.s32.totalorder %s22, 1
      %p82 = por %p80, %p81
      %p83 = scmp.ne.s32.totalorder %s74, %s75
      %p84 = scmp.eq.s32.totalorder %s22, 0
      %p85 = por %p83, %p84
      %p86 = scmp.ne.s32.totalorder %s74, %s75
      %p87 = scmp.eq.s32.totalorder %s23, 1
      %p88 = por %p86, %p87
      %p90 = scmp.ne.s32.totalorder %s75, %s89
      %p91 = scmp.eq.s32.totalorder %s23, 0
      %p92 = por %p90, %p91
      %s94 = sadd.s32 %s93, 1
      %p97 = scmp.eq.s32.totalorder %s17, 1
      %p98 = scmp.ne.s32.totalorder %s93, %s95
      %p99 = scmp.eq.s32.totalorder %s17, 0
      %p100 = por %p98, %p99
      %p101 = scmp.ne.s32.totalorder %s93, %s95
      %p102 = scmp.eq.s32.totalorder %s22, 1
      %p103 = por %p101, %p102
      %p104 = scmp.ne.s32.totalorder %s95, %s96
      %p105 = scmp.eq.s32.totalorder %s22, 0
      %p106 = por %p104, %p105
      %p107 = scmp.ne.s32.totalorder %s95, %s96
      %p108 = scmp.eq.s32.totalorder %s23, 1
      %p109 = por %p107, %p108
      %p111 = scmp.ne.s32.totalorder %s96, %s110
      %p112 = scmp.eq.s32.totalorder %s23, 0
      %p113 = por %p111, %p112
      %s115 = sadd.s32 %s114, 1
      %p118 = scmp.eq.s32.totalorder %s17, 1
      %p119 = scmp.ne.s32.totalorder %s114, %s116
      %p120 = scmp.eq.s32.totalorder %s17, 0
      %p121 = por %p119, %p120
      %p122 = scmp.ne.s32.totalorder %s114, %s116
      %p123 = scmp.eq.s32.totalorder %s22, 1
      %p124 = por %p122, %p123
      %p125 = scmp.ne.s32.totalorder %s116, %s117
      %p126 = scmp.eq.s32.totalorder %s22, 0
      %p127 = por %p125, %p126
      %p128 = scmp.ne.s32.totalorder %s116, %s117
      %p129 = scmp.eq.s32.totalorder %s23, 1
      %p130 = por %p128, %p129
      %p132 = scmp.ne.s32.totalorder %s117, %s131
      %p133 = scmp.eq.s32.totalorder %s23, 0
      %p134 = por %p132, %p133
      %s135 = ssub.s32 %s17, %s24
      %p136 = scmp.eq.s32.totalorder %s135, 0
      %s138 = sadd.s32 %s137, 1
      %s139 = scalar_select %p136, %s137, %s138
      %p142 = pneg %p136
      %p143 = scmp.eq.s32.totalorder %s17, 1
      %p144 = por %p142, %p143
      %p145 = scmp.ne.s32.totalorder %s137, %s140
      %p146 = scmp.eq.s32.totalorder %s17, 0
      %p147 = por %p145, %p146
      %p148 = scmp.ne.s32.totalorder %s137, %s140
      %p149 = scmp.eq.s32.totalorder %s22, 1
      %p150 = por %p148, %p149
      %p151 = scmp.ne.s32.totalorder %s140, %s141
      %p152 = scmp.eq.s32.totalorder %s22, 0
      %p153 = por %p151, %p152
      %p154 = scmp.ne.s32.totalorder %s140, %s141
      %p155 = scmp.eq.s32.totalorder %s23, 1
      %p156 = por %p154, %p155
      %p158 = scmp.ne.s32.totalorder %s141, %s157
      %p159 = scmp.eq.s32.totalorder %s23, 0
      %p160 = por %p158, %p159
      %p161 = scmp.le.s32.totalorder 1, %s17
      %p162 = scmp.lt.s32.totalorder %s17, 3
      %p163 = pnand %p161, %p162
      %p164 = pneg %p163
      // Predicated region
      $region9: #{tpu_custom_call.1} parent=5 // pred_check
        _
      $region10: #{tpu_custom_call.1} parent=5 // pred_check_branch
        %166 = sbr.rel (%p163) target = $region12
      $region11: #{tpu_custom_call.1} parent=5 // pred_region
        %s167 = ssub.s32 %s17, 1
        // Predicated region
        $region13: #{tpu_custom_call.1} parent=11 // pred_check
          %p168 = pneg %p64
        $region14: #{tpu_custom_call.1} parent=11 // pred_check_branch
          %170 = sbr.rel (%p168) target = $region16
        $region15: #{tpu_custom_call.1} parent=11 // pred_region
          _
        $region16: #{tpu_custom_call.1} parent=11 // pred_fallthru
          _
        // Predicated region
        $region17: #{tpu_custom_call.1} parent=11 // pred_check
          %p171 = pneg %p85
        $region18: #{tpu_custom_call.1} parent=11 // pred_check_branch
          %173 = sbr.rel (%p171) target = $region20
        $region19: #{tpu_custom_call.1} parent=11 // pred_region
          _
        $region20: #{tpu_custom_call.1} parent=11 // pred_fallthru
          _
        // Predicated region
        $region21: #{tpu_custom_call.1} parent=11 // pred_check
          %p174 = pneg %p106
        $region22: #{tpu_custom_call.1} parent=11 // pred_check_branch
          %176 = sbr.rel (%p174) target = $region24
        $region23: #{tpu_custom_call.1} parent=11 // pred_region
          _
        $region24: #{tpu_custom_call.1} parent=11 // pred_fallthru
          _
        // Predicated region
        $region25: #{tpu_custom_call.1} parent=11 // pred_check
          %p177 = pneg %p127
        $region26: #{tpu_custom_call.1} parent=11 // pred_check_branch
          %179 = sbr.rel (%p177) target = $region28
        $region27: #{tpu_custom_call.1} parent=11 // pred_region
          _
        $region28: #{tpu_custom_call.1} parent=11 // pred_fallthru
          _
      $region12: #{tpu_custom_call.1} parent=5 // pred_fallthru
        _
      %p180 = scmp.lt.s32.totalorder %s17, 2
      // Predicated region
      $region29: #{tpu_custom_call.1} parent=5 // pred_check
        %p181 = pneg %p180
      $region30: #{tpu_custom_call.1} parent=5 // pred_check_branch
        %183 = sbr.rel (%p181) target = $region32
      $region31: #{tpu_custom_call.1} parent=5 // pred_region
        // Predicated region
        $region33: #{tpu_custom_call.1} parent=31 // pred_check
          %p184 = pneg %p37
        $region34: #{tpu_custom_call.1} parent=31 // pred_check_branch
          %186 = sbr.rel (%p184) target = $region36
        $region35: #{tpu_custom_call.1} parent=31 // pred_region
          %s187 = sand.u32 %s27, 1
          %s188 = scalar_lea.sflag [#allocation3], %s187
          %s189 = sand.u32 %s27, 1
          %s190 = smul.addr %s189, 16
          %s191 = scalar_lea.vmem [#allocation2], %s190
          %s193 = ssub.s32 256, 256
          %194 = vsyncadd %s188, %s193
          %s195 = smul.addr %s17, 2
          %s196 = smul.addr %s195, 128
          %s197 = scalar_lea.hbm %s0, %s196
          %s199 = sshll.u32 %s191, 4
          %s200 = int_to_ptr.vmem [resolvable:$true] %s199
          %202 = dma.hbm_to_vmem [thread:$0]  %s197, 256, %s200, %s188
        $region36: #{tpu_custom_call.1} parent=31 // pred_fallthru
          _
      $region32: #{tpu_custom_call.1} parent=5 // pred_fallthru
        _
      %p203 = scmp.le.s32.totalorder 1, %s17
      %p204 = scmp.lt.s32.totalorder %s17, 3
      %p205 = pnand %p203, %p204
      %p206 = pneg %p205
      // Predicated region
      $region37: #{tpu_custom_call.1} parent=5 // pred_check
        _
      $region38: #{tpu_custom_call.1} parent=5 // pred_check_branch
        %208 = sbr.rel (%p205) target = $region40
      $region39: #{tpu_custom_call.1} parent=5 // pred_region
        %s209 = ssub.s32 %s17, 1
        %s210 = sand.u32 %s30, 1
        %s211 = scalar_lea.sflag [#allocation3], %s210
        %s212 = sand.u32 %s30, 1
        %s213 = smul.addr %s212, 16
        %s214 = scalar_lea.vmem [#allocation2], %s213
        // Predicated region
        $region41: #{tpu_custom_call.1} parent=39 // pred_check
          %p215 = pneg %p43
        $region42: #{tpu_custom_call.1} parent=39 // pred_check_branch
          %217 = sbr.rel (%p215) target = $region44
        $region43: #{tpu_custom_call.1} parent=39 // pred_region
          %218 = dma.done %s211, 256
        $region44: #{tpu_custom_call.1} parent=39 // pred_fallthru
          _
        %s219 = sand.u32 %s30, 1
        %s220 = scalar_lea.sflag [#allocation3], %s219
        %s221 = sand.u32 %s30, 1
        %s222 = smul.addr %s221, 16
        %s223 = scalar_lea.vmem [#allocation2], %s222
        %p224 = pneg %p43
        %p225 = pneg %p40
        %p226 = pneg %p64
        %p227 = pneg %p61
        %p228 = pneg %p85
        %p229 = pneg %p82
        %p230 = pneg %p106
        %p231 = pneg %p103
        %p232 = pneg %p127
        %p233 = pneg %p124
        %p234 = pneg %p153
        %p235 = pneg %p150
        %s236 = sand.u32 %s140, 1
        %s237 = scalar_lea.sflag [#allocation4], %s236
        %s238 = sand.u32 %s140, 1
        %s239 = smul.addr %s238, 16
        %s240 = scalar_lea.vmem [#allocation5], %s239
        %v241 = vld [vmem:[%s214] sm:$0xff]
        %v242 = vld [vmem:[%s214 + $0x8] sm:$0xff]
        %v243 = vld [vmem:[%s4] sm:$0xff]
        %v244 = vld [vmem:[%s2] sm:$0xff]
        %246 = vset.pattern.permute.xlu0 0
        %247 = vperm.xlu0 %246, %v243
        %v248 = vpop.permute.xlu0 %247
        %vm250 = vcmask 64512
        %v252 = vsel %vm250, %v244, 0
        %254 = vmatprep.subr.mxu0 %v242
        %255 = vmatpush1.msra.mxu0 %v241
        %256 = vmatprep.subr.mxu0 0.0
        %257 = vmatpush1.msra.mxu0 0.0
        %258 = vmatprep.subr.mxu0 0.0
        %259 = vmatpush1.msra.mxu0 0.0
        %260 = vmatprep.subr.mxu0 0.0
        %261 = vmatpush1.msra.mxu0 0.0
        %262 = vmatprep.subr.mxu0 0.0
        %263 = vmatpush1.msra.mxu0 0.0
        %264 = vmatprep.subr.mxu0 0.0
        %265 = vmatpush1.msra.mxu0 0.0
        %266 = vmatprep.subr.mxu0 0.0
        %267 = vmatpush1.msra.mxu0 0.0
        %268 = vmatprep.subr.mxu0 0.0
        %269 = vmatpush1.msra.mxu0 0.0
        %270 = vmatprep.subr.mxu0 0.0
        %271 = vmatpush1.msra.mxu0 0.0
        %272 = vmatprep.subr.mxu0 0.0
        %273 = vmatpush1.msra.mxu0 0.0
        %274 = vmatprep.subr.mxu0 0.0
        %275 = vmatpush1.msra.mxu0 0.0
        %276 = vmatprep.subr.mxu0 0.0
        %277 = vmatpush1.msra.mxu0 0.0
        %278 = vmatprep.subr.mxu0 0.0
        %279 = vmatpush1.msra.mxu0 0.0
        %280 = vmatprep.subr.mxu0 0.0
        %281 = vmatpush1.msra.mxu0 0.0
        %282 = vmatprep.subr.mxu0 0.0
        %283 = vmatpush1.msra.mxu0 0.0
        %284 = vmatprep.subr.mxu0 0.0
        %285 = vmatpush1.msra.mxu0 0.0
        %286 = vmatprep.subr.mxu0 0.0
        %287 = vmatpush1.msra.mxu0 0.0
        %288 = vmatprep.subr.mxu0 0.0
        %289 = vmatpush1.msra.mxu0 0.0
        %290 = vmatprep.subr.mxu0 0.0
        %291 = vmatpush1.msra.mxu0 0.0
        %292 = vmatprep.subr.mxu0 0.0
        %293 = vmatpush1.msra.mxu0 0.0
        %294 = vmatprep.subr.mxu0 0.0
        %295 = vmatpush1.msra.mxu0 0.0
        %296 = vmatprep.subr.mxu0 0.0
        %297 = vmatpush1.msra.mxu0 0.0
        %298 = vmatprep.subr.mxu0 0.0
        %299 = vmatpush1.msra.mxu0 0.0
        %300 = vmatprep.subr.mxu0 0.0
        %301 = vmatpush1.msra.mxu0 0.0
        %302 = vmatprep.subr.mxu0 0.0
        %303 = vmatpush1.msra.mxu0 0.0
        %304 = vmatprep.subr.mxu0 0.0
        %305 = vmatpush1.msra.mxu0 0.0
        %306 = vmatprep.subr.mxu0 0.0
        %307 = vmatpush1.msra.mxu0 0.0
        %308 = vmatprep.subr.mxu0 0.0
        %309 = vmatpush1.msra.mxu0 0.0
        %310 = vmatprep.subr.mxu0 0.0
        %311 = vmatpush1.msra.mxu0 0.0
        %312 = vmatprep.subr.mxu0 0.0
        %313 = vmatpush1.msra.mxu0 0.0
        %314 = vmatprep.subr.mxu0 0.0
        %315 = vmatpush1.msra.mxu0 0.0
        %316 = vmatprep.subr.mxu0 0.0
        %317 = vmatpush1.msra.mxu0 0.0
        %318 = vmatprep.mubr.f32.mxu0 0.0
        %319 = vmatmul.mubr.f32.gmra.mrb[0].mxu0 %v252
        %v320 = vpop.f32.mrb[0].mxu0
        %v321 = vadd.f32 %v248, %v320
        %v322 = vpop.f32.mrb[0].mxu0
        %v323 = vadd.f32 %v248, %v322
        %324 = vdwg.mxu0
        %v325 = vld [vmem:[%s1] sm:$0xff]
        %v326 = vld [vmem:[%s1 + $0x8] sm:$0xff]
        %v327 = vld [vmem:[%s1 + $0x10] sm:$0xff]
        %v328 = vld [vmem:[%s1 + $0x18] sm:$0xff]
        %v329 = vld [vmem:[%s1 + $0x20] sm:$0xff]
        %v330 = vld [vmem:[%s1 + $0x28] sm:$0xff]
        %v331 = vld [vmem:[%s1 + $0x30] sm:$0xff]
        %v332 = vld [vmem:[%s1 + $0x38] sm:$0xff]
        %v333 = vld [vmem:[%s1 + $0x40] sm:$0xff]
        %v334 = vld [vmem:[%s1 + $0x48] sm:$0xff]
        %v335 = vld [vmem:[%s1 + $0x50] sm:$0xff]
        %v336 = vld [vmem:[%s1 + $0x58] sm:$0xff]
        %v337 = vld [vmem:[%s1 + $0x60] sm:$0xff]
        %v338 = vld [vmem:[%s1 + $0x68] sm:$0xff]
        %v339 = vld [vmem:[%s1 + $0x70] sm:$0xff]
        %v340 = vld [vmem:[%s1 + $0x78] sm:$0xff]
        %341 = vmatprep.subr.mxu0 0.0
        %342 = vmatpush1.msra.mxu0 %v325
        %343 = vmatprep.subr.mxu0 0.0
        %344 = vmatpush1.msra.mxu0 %v326
        %345 = vmatprep.subr.mxu0 0.0
        %346 = vmatpush1.msra.mxu0 %v327
        %347 = vmatprep.subr.mxu0 0.0
        %348 = vmatpush1.msra.mxu0 %v328
        %349 = vmatprep.subr.mxu0 0.0
        %350 = vmatpush1.msra.mxu0 %v329
        %351 = vmatprep.subr.mxu0 0.0
        %352 = vmatpush1.msra.mxu0 %v330
        %353 = vmatprep.subr.mxu0 0.0
        %354 = vmatpush1.msra.mxu0 %v331
        %355 = vmatprep.subr.mxu0 0.0
        %356 = vmatpush1.msra.mxu0 %v332
        %357 = vmatprep.subr.mxu0 0.0
        %358 = vmatpush1.msra.mxu0 %v333
        %359 = vmatprep.subr.mxu0 0.0
        %360 = vmatpush1.msra.mxu0 %v334
        %361 = vmatprep.subr.mxu0 0.0
        %362 = vmatpush1.msra.mxu0 %v335
        %363 = vmatprep.subr.mxu0 0.0
        %364 = vmatpush1.msra.mxu0 %v336
        %365 = vmatprep.subr.mxu0 0.0
        %366 = vmatpush1.msra.mxu0 %v337
        %367 = vmatprep.subr.mxu0 0.0
        %368 = vmatpush1.msra.mxu0 %v338
        %369 = vmatprep.subr.mxu0 0.0
        %370 = vmatpush1.msra.mxu0 %v339
        %371 = vmatprep.subr.mxu0 0.0
        %372 = vmatpush1.msra.mxu0 %v340
        %373 = vmatprep.subr.mxu0 0.0
        %374 = vmatpush1.msra.mxu0 0.0
        %375 = vmatprep.subr.mxu0 0.0
        %376 = vmatpush1.msra.mxu0 0.0
        %377 = vmatprep.subr.mxu0 0.0
        %378 = vmatpush1.msra.mxu0 0.0
        %379 = vmatprep.subr.mxu0 0.0
        %380 = vmatpush1.msra.mxu0 0.0
        %381 = vmatprep.subr.mxu0 0.0
        %382 = vmatpush1.msra.mxu0 0.0
        %383 = vmatprep.subr.mxu0 0.0
        %384 = vmatpush1.msra.mxu0 0.0
        %385 = vmatprep.subr.mxu0 0.0
        %386 = vmatpush1.msra.mxu0 0.0
        %387 = vmatprep.subr.mxu0 0.0
        %388 = vmatpush1.msra.mxu0 0.0
        %389 = vmatprep.subr.mxu0 0.0
        %390 = vmatpush1.msra.mxu0 0.0
        %391 = vmatprep.subr.mxu0 0.0
        %392 = vmatpush1.msra.mxu0 0.0
        %393 = vmatprep.subr.mxu0 0.0
        %394 = vmatpush1.msra.mxu0 0.0
        %395 = vmatprep.subr.mxu0 0.0
        %396 = vmatpush1.msra.mxu0 0.0
        %397 = vmatprep.subr.mxu0 0.0
        %398 = vmatpush1.msra.mxu0 0.0
        %399 = vmatprep.subr.mxu0 0.0
        %400 = vmatpush1.msra.mxu0 0.0
        %401 = vmatprep.subr.mxu0 0.0
        %402 = vmatpush1.msra.mxu0 0.0
        %403 = vmatprep.subr.mxu0 0.0
        %404 = vmatpush1.msra.mxu0 0.0
        %405 = vmatprep.mubr.f32.mxu0 0.0
        %406 = vmatmul.mubr.f32.gmra.mrb[0].mxu0 %v321
        %v407 = vpop.f32.mrb[0].mxu0
        %v408 = vadd.f32 0.0, %v407
        %v409 = vpop.f32.mrb[0].mxu0
        %410 = vdwg.mxu0
        %411 = vmatprep.subr.mxu0 0.0
        %412 = vmatpush1.msra.mxu0 %v325
        %413 = vmatprep.subr.mxu0 0.0
        %414 = vmatpush1.msra.mxu0 %v326
        %415 = vmatprep.subr.mxu0 0.0
        %416 = vmatpush1.msra.mxu0 %v327
        %417 = vmatprep.subr.mxu0 0.0
        %418 = vmatpush1.msra.mxu0 %v328
        %419 = vmatprep.subr.mxu0 0.0
        %420 = vmatpush1.msra.mxu0 %v329
        %421 = vmatprep.subr.mxu0 0.0
        %422 = vmatpush1.msra.mxu0 %v330
        %423 = vmatprep.subr.mxu0 0.0
        %424 = vmatpush1.msra.mxu0 %v331
        %425 = vmatprep.subr.mxu0 0.0
        %426 = vmatpush1.msra.mxu0 %v332
        %427 = vmatprep.subr.mxu0 0.0
        %428 = vmatpush1.msra.mxu0 %v333
        %429 = vmatprep.subr.mxu0 0.0
        %430 = vmatpush1.msra.mxu0 %v334
        %431 = vmatprep.subr.mxu0 0.0
        %432 = vmatpush1.msra.mxu0 %v335
        %433 = vmatprep.subr.mxu0 0.0
        %434 = vmatpush1.msra.mxu0 %v336
        %435 = vmatprep.subr.mxu0 0.0
        %436 = vmatpush1.msra.mxu0 %v337
        %437 = vmatprep.subr.mxu0 0.0
        %438 = vmatpush1.msra.mxu0 %v338
        %439 = vmatprep.subr.mxu0 0.0
        %440 = vmatpush1.msra.mxu0 %v339
        %441 = vmatprep.subr.mxu0 0.0
        %442 = vmatpush1.msra.mxu0 %v340
        %443 = vmatprep.subr.mxu0 0.0
        %444 = vmatpush1.msra.mxu0 0.0
        %445 = vmatprep.subr.mxu0 0.0
        %446 = vmatpush1.msra.mxu0 0.0
        %447 = vmatprep.subr.mxu0 0.0
        %448 = vmatpush1.msra.mxu0 0.0
        %449 = vmatprep.subr.mxu0 0.0
        %450 = vmatpush1.msra.mxu0 0.0
        %451 = vmatprep.subr.mxu0 0.0
        %452 = vmatpush1.msra.mxu0 0.0
        %453 = vmatprep.subr.mxu0 0.0
        %454 = vmatpush1.msra.mxu0 0.0
        %455 = vmatprep.subr.mxu0 0.0
        %456 = vmatpush1.msra.mxu0 0.0
        %457 = vmatprep.subr.mxu0 0.0
        %458 = vmatpush1.msra.mxu0 0.0
        %459 = vmatprep.subr.mxu0 0.0
        %460 = vmatpush1.msra.mxu0 0.0
        %461 = vmatprep.subr.mxu0 0.0
        %462 = vmatpush1.msra.mxu0 0.0
        %463 = vmatprep.subr.mxu0 0.0
        %464 = vmatpush1.msra.mxu0 0.0
        %465 = vmatprep.subr.mxu0 0.0
        %466 = vmatpush1.msra.mxu0 0.0
        %467 = vmatprep.subr.mxu0 0.0
        %468 = vmatpush1.msra.mxu0 0.0
        %469 = vmatprep.subr.mxu0 0.0
        %470 = vmatpush1.msra.mxu0 0.0
        %471 = vmatprep.subr.mxu0 0.0
        %472 = vmatpush1.msra.mxu0 0.0
        %473 = vmatprep.subr.mxu0 0.0
        %474 = vmatpush1.msra.mxu0 0.0
        %475 = vmatprep.mubr.f32.mxu0 0.0
        %476 = vmatmul.mubr.f32.gmra.mrb[0].mxu0 %v323
        %v477 = vpop.f32.mrb[0].mxu0
        %v478 = vadd.f32 0.0, %v477
        %v479 = vpop.f32.mrb[0].mxu0
        %480 = vdwg.mxu0
        %481 = vset.pattern.permute.xlu0 1
        %482 = vperm.xlu0 %481, %v243
        %v483 = vpop.permute.xlu0 %482
        %v485 = vadd.f32 %v408, %v483
        %v486 = vadd.f32 %v478, %v483
        %v487 = vmax.f32 %v485, 0.0
        %v488 = vmax.f32 %v486, 0.0
        %v489 = vlaneseq
        %v490 = vand.u32 %v489, 127
        %v491 = vadd.s32 %v490, 128
        %492 = vrot.lane.b32.xlu0 %v487, 64
        %v493 = vpop.permute.xlu0 %492
        %494 = vrot.lane.b32.xlu0 %v488, 64
        %v495 = vpop.permute.xlu0 %494
        %vm496 = vcmp.lt.s32.totalorder %v490, 64
        %v497 = vsel %vm496, %v493, %v495
        %v498 = vsel %vm496, %v495, %v493
        %vm499 = vcmp.ge.s32.totalorder %v490, 64
        %vm500 = vcmp.ge.s32.totalorder %v491, 64
        %v501 = vsel %vm499, %v498, 0.0
        %v502 = vsel %vm500, %v497, 0.0
        %v503 = vld [vmem:[%s3] sm:$0xff]
        %504 = vrot.lane.b32.xlu0 %v487, 48
        %v505 = vpop.permute.xlu0 %504
        %506 = vrot.lane.b32.xlu0 %v488, 48
        %v507 = vpop.permute.xlu0 %506
        %vm508 = vcmp.lt.s32.totalorder %v490, 48
        %v509 = vsel %vm508, %v505, %v507
        %v510 = vsel %vm508, %v507, %v505
        %vm511 = vcmp.ge.s32.totalorder %v490, 48
        %vm512 = vcmp.ge.s32.totalorder %v491, 48
        %v513 = vsel %vm511, %v510, 0.0
        %v514 = vsel %vm512, %v509, 0.0
        %s515 = scalar_lea.vmem %s3, 8
        %v516 = vld [vmem:[%s515] sm:$0xff]
        %v518 = vsel %vm250, %v516, 0
        %520 = vmatprep.subr.mxu0 %v514
        %521 = vmatpush1.msra.mxu0 %v513
        %522 = vmatprep.subr.mxu0 0.0
        %523 = vmatpush1.msra.mxu0 0.0
        %524 = vmatprep.subr.mxu0 0.0
        %525 = vmatpush1.msra.mxu0 0.0
        %526 = vmatprep.subr.mxu0 0.0
        %527 = vmatpush1.msra.mxu0 0.0
        %528 = vmatprep.subr.mxu0 0.0
        %529 = vmatpush1.msra.mxu0 0.0
        %530 = vmatprep.subr.mxu0 0.0
        %531 = vmatpush1.msra.mxu0 0.0
        %532 = vmatprep.subr.mxu0 0.0
        %533 = vmatpush1.msra.mxu0 0.0
        %534 = vmatprep.subr.mxu0 0.0
        %535 = vmatpush1.msra.mxu0 0.0
        %536 = vmatprep.subr.mxu0 0.0
        %537 = vmatpush1.msra.mxu0 0.0
        %538 = vmatprep.subr.mxu0 0.0
        %539 = vmatpush1.msra.mxu0 0.0
        %540 = vmatprep.subr.mxu0 0.0
        %541 = vmatpush1.msra.mxu0 0.0
        %542 = vmatprep.subr.mxu0 0.0
        %543 = vmatpush1.msra.mxu0 0.0
        %544 = vmatprep.subr.mxu0 0.0
        %545 = vmatpush1.msra.mxu0 0.0
        %546 = vmatprep.subr.mxu0 0.0
        %547 = vmatpush1.msra.mxu0 0.0
        %548 = vmatprep.subr.mxu0 0.0
        %549 = vmatpush1.msra.mxu0 0.0
        %550 = vmatprep.subr.mxu0 0.0
        %551 = vmatpush1.msra.mxu0 0.0
        %552 = vmatprep.subr.mxu0 0.0
        %553 = vmatpush1.msra.mxu0 0.0
        %554 = vmatprep.subr.mxu0 0.0
        %555 = vmatpush1.msra.mxu0 0.0
        %556 = vmatprep.subr.mxu0 0.0
        %557 = vmatpush1.msra.mxu0 0.0
        %558 = vmatprep.subr.mxu0 0.0
        %559 = vmatpush1.msra.mxu0 0.0
        %560 = vmatprep.subr.mxu0 0.0
        %561 = vmatpush1.msra.mxu0 0.0
        %562 = vmatprep.subr.mxu0 0.0
        %563 = vmatpush1.msra.mxu0 0.0
        %564 = vmatprep.subr.mxu0 0.0
        %565 = vmatpush1.msra.mxu0 0.0
        %566 = vmatprep.subr.mxu0 0.0
        %567 = vmatpush1.msra.mxu0 0.0
        %568 = vmatprep.subr.mxu0 0.0
        %569 = vmatpush1.msra.mxu0 0.0
        %570 = vmatprep.subr.mxu0 0.0
        %571 = vmatpush1.msra.mxu0 0.0
        %572 = vmatprep.subr.mxu0 0.0
        %573 = vmatpush1.msra.mxu0 0.0
        %574 = vmatprep.subr.mxu0 0.0
        %575 = vmatpush1.msra.mxu0 0.0
        %576 = vmatprep.subr.mxu0 0.0
        %577 = vmatpush1.msra.mxu0 0.0
        %578 = vmatprep.subr.mxu0 0.0
        %579 = vmatpush1.msra.mxu0 0.0
        %580 = vmatprep.subr.mxu0 0.0
        %581 = vmatpush1.msra.mxu0 0.0
        %582 = vmatprep.subr.mxu0 0.0
        %583 = vmatpush1.msra.mxu0 0.0
        %584 = vmatprep.mubr.f32.mxu0 0.0
        %585 = vmatmul.mubr.f32.gmra.mrb[0].mxu0 %v518
        %v586 = vpop.f32.mrb[0].mxu0
        %v587 = vadd.f32 0.0, %v586
        %v588 = vpop.f32.mrb[0].mxu0
        %v589 = vadd.f32 0.0, %v588
        %590 = vdwg.mxu0
        %v592 = vsel %vm250, %v503, 0
        %594 = vmatprep.subr.mxu0 %v502
        %595 = vmatpush1.msra.mxu0 %v501
        %596 = vmatprep.subr.mxu0 0.0
        %597 = vmatpush1.msra.mxu0 0.0
        %598 = vmatprep.subr.mxu0 0.0
        %599 = vmatpush1.msra.mxu0 0.0
        %600 = vmatprep.subr.mxu0 0.0
        %601 = vmatpush1.msra.mxu0 0.0
        %602 = vmatprep.subr.mxu0 0.0
        %603 = vmatpush1.msra.mxu0 0.0
        %604 = vmatprep.subr.mxu0 0.0
        %605 = vmatpush1.msra.mxu0 0.0
        %606 = vmatprep.subr.mxu0 0.0
        %607 = vmatpush1.msra.mxu0 0.0
        %608 = vmatprep.subr.mxu0 0.0
        %609 = vmatpush1.msra.mxu0 0.0
        %610 = vmatprep.subr.mxu0 0.0
        %611 = vmatpush1.msra.mxu0 0.0
        %612 = vmatprep.subr.mxu0 0.0
        %613 = vmatpush1.msra.mxu0 0.0
        %614 = vmatprep.subr.mxu0 0.0
        %615 = vmatpush1.msra.mxu0 0.0
        %616 = vmatprep.subr.mxu0 0.0
        %617 = vmatpush1.msra.mxu0 0.0
        %618 = vmatprep.subr.mxu0 0.0
        %619 = vmatpush1.msra.mxu0 0.0
        %620 = vmatprep.subr.mxu0 0.0
        %621 = vmatpush1.msra.mxu0 0.0
        %622 = vmatprep.subr.mxu0 0.0
        %623 = vmatpush1.msra.mxu0 0.0
        %624 = vmatprep.subr.mxu0 0.0
        %625 = vmatpush1.msra.mxu0 0.0
        %626 = vmatprep.subr.mxu0 0.0
        %627 = vmatpush1.msra.mxu0 0.0
        %628 = vmatprep.subr.mxu0 0.0
        %629 = vmatpush1.msra.mxu0 0.0
        %630 = vmatprep.subr.mxu0 0.0
        %631 = vmatpush1.msra.mxu0 0.0
        %632 = vmatprep.subr.mxu0 0.0
        %633 = vmatpush1.msra.mxu0 0.0
        %634 = vmatprep.subr.mxu0 0.0
        %635 = vmatpush1.msra.mxu0 0.0
        %636 = vmatprep.subr.mxu0 0.0
        %637 = vmatpush1.msra.mxu0 0.0
        %638 = vmatprep.subr.mxu0 0.0
        %639 = vmatpush1.msra.mxu0 0.0
        %640 = vmatprep.subr.mxu0 0.0
        %641 = vmatpush1.msra.mxu0 0.0
        %642 = vmatprep.subr.mxu0 0.0
        %643 = vmatpush1.msra.mxu0 0.0
        %644 = vmatprep.subr.mxu0 0.0
        %645 = vmatpush1.msra.mxu0 0.0
        %646 = vmatprep.subr.mxu0 0.0
        %647 = vmatpush1.msra.mxu0 0.0
        %648 = vmatprep.subr.mxu0 0.0
        %649 = vmatpush1.msra.mxu0 0.0
        %650 = vmatprep.subr.mxu0 0.0
        %651 = vmatpush1.msra.mxu0 0.0
        %652 = vmatprep.subr.mxu0 0.0
        %653 = vmatpush1.msra.mxu0 0.0
        %654 = vmatprep.subr.mxu0 0.0
        %655 = vmatpush1.msra.mxu0 0.0
        %656 = vmatprep.subr.mxu0 0.0
        %657 = vmatpush1.msra.mxu0 0.0
        %658 = vmatprep.mubr.f32.mxu0 0.0
        %659 = vmatmul.mubr.f32.gmra.mrb[0].mxu0 %v592
        %v660 = vpop.f32.mrb[0].mxu0
        %v661 = vadd.f32 %v587, %v660
        %v662 = vpop.f32.mrb[0].mxu0
        %v663 = vadd.f32 %v589, %v662
        %664 = vdwg.mxu0
        %665 = vrot.lane.b32.xlu0 %v487, 32
        %v666 = vpop.permute.xlu0 %665
        %667 = vrot.lane.b32.xlu0 %v488, 32
        %v668 = vpop.permute.xlu0 %667
        %vm669 = vcmp.lt.s32.totalorder %v490, 32
        %v670 = vsel %vm669, %v666, %v668
        %v671 = vsel %vm669, %v668, %v666
        %vm672 = vcmp.ge.s32.totalorder %v490, 32
        %vm673 = vcmp.ge.s32.totalorder %v491, 32
        %v674 = vsel %vm672, %v671, 0.0
        %v675 = vsel %vm673, %v670, 0.0
        %s676 = scalar_lea.vmem %s3, 16
        %v677 = vld [vmem:[%s676] sm:$0xff]
        %v679 = vsel %vm250, %v677, 0
        %681 = vmatprep.subr.mxu0 %v675
        %682 = vmatpush1.msra.mxu0 %v674
        %683 = vmatprep.subr.mxu0 0.0
        %684 = vmatpush1.msra.mxu0 0.0
        %685 = vmatprep.subr.mxu0 0.0
        %686 = vmatpush1.msra.mxu0 0.0
        %687 = vmatprep.subr.mxu0 0.0
        %688 = vmatpush1.msra.mxu0 0.0
        %689 = vmatprep.subr.mxu0 0.0
        %690 = vmatpush1.msra.mxu0 0.0
        %691 = vmatprep.subr.mxu0 0.0
        %692 = vmatpush1.msra.mxu0 0.0
        %693 = vmatprep.subr.mxu0 0.0
        %694 = vmatpush1.msra.mxu0 0.0
        %695 = vmatprep.subr.mxu0 0.0
        %696 = vmatpush1.msra.mxu0 0.0
        %697 = vmatprep.subr.mxu0 0.0
        %698 = vmatpush1.msra.mxu0 0.0
        %699 = vmatprep.subr.mxu0 0.0
        %700 = vmatpush1.msra.mxu0 0.0
        %701 = vmatprep.subr.mxu0 0.0
        %702 = vmatpush1.msra.mxu0 0.0
        %703 = vmatprep.subr.mxu0 0.0
        %704 = vmatpush1.msra.mxu0 0.0
        %705 = vmatprep.subr.mxu0 0.0
        %706 = vmatpush1.msra.mxu0 0.0
        %707 = vmatprep.subr.mxu0 0.0
        %708 = vmatpush1.msra.mxu0 0.0
        %709 = vmatprep.subr.mxu0 0.0
        %710 = vmatpush1.msra.mxu0 0.0
        %711 = vmatprep.subr.mxu0 0.0
        %712 = vmatpush1.msra.mxu0 0.0
        %713 = vmatprep.subr.mxu0 0.0
        %714 = vmatpush1.msra.mxu0 0.0
        %715 = vmatprep.subr.mxu0 0.0
        %716 = vmatpush1.msra.mxu0 0.0
        %717 = vmatprep.subr.mxu0 0.0
        %718 = vmatpush1.msra.mxu0 0.0
        %719 = vmatprep.subr.mxu0 0.0
        %720 = vmatpush1.msra.mxu0 0.0
        %721 = vmatprep.subr.mxu0 0.0
        %722 = vmatpush1.msra.mxu0 0.0
        %723 = vmatprep.subr.mxu0 0.0
        %724 = vmatpush1.msra.mxu0 0.0
        %725 = vmatprep.subr.mxu0 0.0
        %726 = vmatpush1.msra.mxu0 0.0
        %727 = vmatprep.subr.mxu0 0.0
        %728 = vmatpush1.msra.mxu0 0.0
        %729 = vmatprep.subr.mxu0 0.0
        %730 = vmatpush1.msra.mxu0 0.0
        %731 = vmatprep.subr.mxu0 0.0
        %732 = vmatpush1.msra.mxu0 0.0
        %733 = vmatprep.subr.mxu0 0.0
        %734 = vmatpush1.msra.mxu0 0.0
        %735 = vmatprep.subr.mxu0 0.0
        %736 = vmatpush1.msra.mxu0 0.0
        %737 = vmatprep.subr.mxu0 0.0
        %738 = vmatpush1.msra.mxu0 0.0
        %739 = vmatprep.subr.mxu0 0.0
        %740 = vmatpush1.msra.mxu0 0.0
        %741 = vmatprep.subr.mxu0 0.0
        %742 = vmatpush1.msra.mxu0 0.0
        %743 = vmatprep.subr.mxu0 0.0
        %744 = vmatpush1.msra.mxu0 0.0
        %745 = vmatprep.mubr.f32.mxu0 0.0
        %746 = vmatmul.mubr.f32.gmra.mrb[0].mxu0 %v679
        %v747 = vpop.f32.mrb[0].mxu0
        %v748 = vadd.f32 0.0, %v747
        %v749 = vpop.f32.mrb[0].mxu0
        %v750 = vadd.f32 0.0, %v749
        %751 = vdwg.mxu0
        %v752 = vadd.f32 %v661, %v748
        %v753 = vadd.f32 %v663, %v750
        %754 = vrot.lane.b32.xlu0 %v487, 16
        %v755 = vpop.permute.xlu0 %754
        %756 = vrot.lane.b32.xlu0 %v488, 16
        %v757 = vpop.permute.xlu0 %756
        %vm758 = vcmp.lt.s32.totalorder %v490, 16
        %v759 = vsel %vm758, %v755, %v757
        %v760 = vsel %vm758, %v757, %v755
        %vm761 = vcmp.ge.s32.totalorder %v490, 16
        %vm762 = vcmp.ge.s32.totalorder %v491, 16
        %v763 = vsel %vm761, %v760, 0.0
        %v764 = vsel %vm762, %v759, 0.0
        %s765 = scalar_lea.vmem %s3, 24
        %v766 = vld [vmem:[%s765] sm:$0xff]
        %v768 = vsel %vm250, %v766, 0
        %770 = vmatprep.subr.mxu0 %v764
        %771 = vmatpush1.msra.mxu0 %v763
        %772 = vmatprep.subr.mxu0 0.0
        %773 = vmatpush1.msra.mxu0 0.0
        %774 = vmatprep.subr.mxu0 0.0
        %775 = vmatpush1.msra.mxu0 0.0
        %776 = vmatprep.subr.mxu0 0.0
        %777 = vmatpush1.msra.mxu0 0.0
        %778 = vmatprep.subr.mxu0 0.0
        %779 = vmatpush1.msra.mxu0 0.0
        %780 = vmatprep.subr.mxu0 0.0
        %781 = vmatpush1.msra.mxu0 0.0
        %782 = vmatprep.subr.mxu0 0.0
        %783 = vmatpush1.msra.mxu0 0.0
        %784 = vmatprep.subr.mxu0 0.0
        %785 = vmatpush1.msra.mxu0 0.0
        %786 = vmatprep.subr.mxu0 0.0
        %787 = vmatpush1.msra.mxu0 0.0
        %788 = vmatprep.subr.mxu0 0.0
        %789 = vmatpush1.msra.mxu0 0.0
        %790 = vmatprep.subr.mxu0 0.0
        %791 = vmatpush1.msra.mxu0 0.0
        %792 = vmatprep.subr.mxu0 0.0
        %793 = vmatpush1.msra.mxu0 0.0
        %794 = vmatprep.subr.mxu0 0.0
        %795 = vmatpush1.msra.mxu0 0.0
        %796 = vmatprep.subr.mxu0 0.0
        %797 = vmatpush1.msra.mxu0 0.0
        %798 = vmatprep.subr.mxu0 0.0
        %799 = vmatpush1.msra.mxu0 0.0
        %800 = vmatprep.subr.mxu0 0.0
        %801 = vmatpush1.msra.mxu0 0.0
        %802 = vmatprep.subr.mxu0 0.0
        %803 = vmatpush1.msra.mxu0 0.0
        %804 = vmatprep.subr.mxu0 0.0
        %805 = vmatpush1.msra.mxu0 0.0
        %806 = vmatprep.subr.mxu0 0.0
        %807 = vmatpush1.msra.mxu0 0.0
        %808 = vmatprep.subr.mxu0 0.0
        %809 = vmatpush1.msra.mxu0 0.0
        %810 = vmatprep.subr.mxu0 0.0
        %811 = vmatpush1.msra.mxu0 0.0
        %812 = vmatprep.subr.mxu0 0.0
        %813 = vmatpush1.msra.mxu0 0.0
        %814 = vmatprep.subr.mxu0 0.0
        %815 = vmatpush1.msra.mxu0 0.0
        %816 = vmatprep.subr.mxu0 0.0
        %817 = vmatpush1.msra.mxu0 0.0
        %818 = vmatprep.subr.mxu0 0.0
        %819 = vmatpush1.msra.mxu0 0.0
        %820 = vmatprep.subr.mxu0 0.0
        %821 = vmatpush1.msra.mxu0 0.0
        %822 = vmatprep.subr.mxu0 0.0
        %823 = vmatpush1.msra.mxu0 0.0
        %824 = vmatprep.subr.mxu0 0.0
        %825 = vmatpush1.msra.mxu0 0.0
        %826 = vmatprep.subr.mxu0 0.0
        %827 = vmatpush1.msra.mxu0 0.0
        %828 = vmatprep.subr.mxu0 0.0
        %829 = vmatpush1.msra.mxu0 0.0
        %830 = vmatprep.subr.mxu0 0.0
        %831 = vmatpush1.msra.mxu0 0.0
        %832 = vmatprep.subr.mxu0 0.0
        %833 = vmatpush1.msra.mxu0 0.0
        %834 = vmatprep.mubr.f32.mxu0 0.0
        %835 = vmatmul.mubr.f32.gmra.mrb[0].mxu0 %v768
        %v836 = vpop.f32.mrb[0].mxu0
        %v837 = vadd.f32 0.0, %v836
        %v838 = vpop.f32.mrb[0].mxu0
        %v839 = vadd.f32 0.0, %v838
        %840 = vdwg.mxu0
        %v841 = vadd.f32 %v752, %v837
        %v842 = vadd.f32 %v753, %v839
        %s843 = scalar_lea.vmem %s3, 32
        %v844 = vld [vmem:[%s843] sm:$0xff]
        %v846 = vsel %vm250, %v844, 0
        %848 = vmatprep.subr.mxu0 %v488
        %849 = vmatpush1.msra.mxu0 %v487
        %850 = vmatprep.subr.mxu0 0.0
        %851 = vmatpush1.msra.mxu0 0.0
        %852 = vmatprep.subr.mxu0 0.0
        %853 = vmatpush1.msra.mxu0 0.0
        %854 = vmatprep.subr.mxu0 0.0
        %855 = vmatpush1.msra.mxu0 0.0
        %856 = vmatprep.subr.mxu0 0.0
        %857 = vmatpush1.msra.mxu0 0.0
        %858 = vmatprep.subr.mxu0 0.0
        %859 = vmatpush1.msra.mxu0 0.0
        %860 = vmatprep.subr.mxu0 0.0
        %861 = vmatpush1.msra.mxu0 0.0
        %862 = vmatprep.subr.mxu0 0.0
        %863 = vmatpush1.msra.mxu0 0.0
        %864 = vmatprep.subr.mxu0 0.0
        %865 = vmatpush1.msra.mxu0 0.0
        %866 = vmatprep.subr.mxu0 0.0
        %867 = vmatpush1.msra.mxu0 0.0
        %868 = vmatprep.subr.mxu0 0.0
        %869 = vmatpush1.msra.mxu0 0.0
        %870 = vmatprep.subr.mxu0 0.0
        %871 = vmatpush1.msra.mxu0 0.0
        %872 = vmatprep.subr.mxu0 0.0
        %873 = vmatpush1.msra.mxu0 0.0
        %874 = vmatprep.subr.mxu0 0.0
        %875 = vmatpush1.msra.mxu0 0.0
        %876 = vmatprep.subr.mxu0 0.0
        %877 = vmatpush1.msra.mxu0 0.0
        %878 = vmatprep.subr.mxu0 0.0
        %879 = vmatpush1.msra.mxu0 0.0
        %880 = vmatprep.subr.mxu0 0.0
        %881 = vmatpush1.msra.mxu0 0.0
        %882 = vmatprep.subr.mxu0 0.0
        %883 = vmatpush1.msra.mxu0 0.0
        %884 = vmatprep.subr.mxu0 0.0
        %885 = vmatpush1.msra.mxu0 0.0
        %886 = vmatprep.subr.mxu0 0.0
        %887 = vmatpush1.msra.mxu0 0.0
        %888 = vmatprep.subr.mxu0 0.0
        %889 = vmatpush1.msra.mxu0 0.0
        %890 = vmatprep.subr.mxu0 0.0
        %891 = vmatpush1.msra.mxu0 0.0
        %892 = vmatprep.subr.mxu0 0.0
        %893 = vmatpush1.msra.mxu0 0.0
        %894 = vmatprep.subr.mxu0 0.0
        %895 = vmatpush1.msra.mxu0 0.0
        %896 = vmatprep.subr.mxu0 0.0
        %897 = vmatpush1.msra.mxu0 0.0
        %898 = vmatprep.subr.mxu0 0.0
        %899 = vmatpush1.msra.mxu0 0.0
        %900 = vmatprep.subr.mxu0 0.0
        %901 = vmatpush1.msra.mxu0 0.0
        %902 = vmatprep.subr.mxu0 0.0
        %903 = vmatpush1.msra.mxu0 0.0
        %904 = vmatprep.subr.mxu0 0.0
        %905 = vmatpush1.msra.mxu0 0.0
        %906 = vmatprep.subr.mxu0 0.0
        %907 = vmatpush1.msra.mxu0 0.0
        %908 = vmatprep.subr.mxu0 0.0
        %909 = vmatpush1.msra.mxu0 0.0
        %910 = vmatprep.subr.mxu0 0.0
        %911 = vmatpush1.msra.mxu0 0.0
        %912 = vmatprep.mubr.f32.mxu0 0.0
        %913 = vmatmul.mubr.f32.gmra.mrb[0].mxu0 %v846
        %v914 = vpop.f32.mrb[0].mxu0
        %v915 = vadd.f32 0.0, %v914
        %v916 = vpop.f32.mrb[0].mxu0
        %v917 = vadd.f32 0.0, %v916
        %918 = vdwg.mxu0
        %v919 = vadd.f32 %v841, %v915
        %v920 = vadd.f32 %v842, %v917
        %921 = vrot.lane.b32.xlu0 %v487, 112
        %v922 = vpop.permute.xlu0 %921
        %923 = vrot.lane.b32.xlu0 %v488, 112
        %v924 = vpop.permute.xlu0 %923
        %vm925 = vcmp.lt.s32.totalorder %v490, 112
        %v926 = vsel %vm925, %v922, %v924
        %v927 = vsel %vm925, %v924, %v922
        %vm928 = vcmp.lt.s32.totalorder %v490, 240
        %vm929 = vcmp.lt.s32.totalorder %v491, 240
        %v930 = vsel %vm928, %v926, 0.0
        %v931 = vsel %vm929, %v927, 0.0
        %s932 = scalar_lea.vmem %s3, 40
        %v933 = vld [vmem:[%s932] sm:$0xff]
        %v935 = vsel %vm250, %v933, 0
        %937 = vmatprep.subr.mxu0 %v931
        %938 = vmatpush1.msra.mxu0 %v930
        %939 = vmatprep.subr.mxu0 0.0
        %940 = vmatpush1.msra.mxu0 0.0
        %941 = vmatprep.subr.mxu0 0.0
        %942 = vmatpush1.msra.mxu0 0.0
        %943 = vmatprep.subr.mxu0 0.0
        %944 = vmatpush1.msra.mxu0 0.0
        %945 = vmatprep.subr.mxu0 0.0
        %946 = vmatpush1.msra.mxu0 0.0
        %947 = vmatprep.subr.mxu0 0.0
        %948 = vmatpush1.msra.mxu0 0.0
        %949 = vmatprep.subr.mxu0 0.0
        %950 = vmatpush1.msra.mxu0 0.0
        %951 = vmatprep.subr.mxu0 0.0
        %952 = vmatpush1.msra.mxu0 0.0
        %953 = vmatprep.subr.mxu0 0.0
        %954 = vmatpush1.msra.mxu0 0.0
        %955 = vmatprep.subr.mxu0 0.0
        %956 = vmatpush1.msra.mxu0 0.0
        %957 = vmatprep.subr.mxu0 0.0
        %958 = vmatpush1.msra.mxu0 0.0
        %959 = vmatprep.subr.mxu0 0.0
        %960 = vmatpush1.msra.mxu0 0.0
        %961 = vmatprep.subr.mxu0 0.0
        %962 = vmatpush1.msra.mxu0 0.0
        %963 = vmatprep.subr.mxu0 0.0
        %964 = vmatpush1.msra.mxu0 0.0
        %965 = vmatprep.subr.mxu0 0.0
        %966 = vmatpush1.msra.mxu0 0.0
        %967 = vmatprep.subr.mxu0 0.0
        %968 = vmatpush1.msra.mxu0 0.0
        %969 = vmatprep.subr.mxu0 0.0
        %970 = vmatpush1.msra.mxu0 0.0
        %971 = vmatprep.subr.mxu0 0.0
        %972 = vmatpush1.msra.mxu0 0.0
        %973 = vmatprep.subr.mxu0 0.0
        %974 = vmatpush1.msra.mxu0 0.0
        %975 = vmatprep.subr.mxu0 0.0
        %976 = vmatpush1.msra.mxu0 0.0
        %977 = vmatprep.subr.mxu0 0.0
        %978 = vmatpush1.msra.mxu0 0.0
        %979 = vmatprep.subr.mxu0 0.0
        %980 = vmatpush1.msra.mxu0 0.0
        %981 = vmatprep.subr.mxu0 0.0
        %982 = vmatpush1.msra.mxu0 0.0
        %983 = vmatprep.subr.mxu0 0.0
        %984 = vmatpush1.msra.mxu0 0.0
        %985 = vmatprep.subr.mxu0 0.0
        %986 = vmatpush1.msra.mxu0 0.0
        %987 = vmatprep.subr.mxu0 0.0
        %988 = vmatpush1.msra.mxu0 0.0
        %989 = vmatprep.subr.mxu0 0.0
        %990 = vmatpush1.msra.mxu0 0.0
        %991 = vmatprep.subr.mxu0 0.0
        %992 = vmatpush1.msra.mxu0 0.0
        %993 = vmatprep.subr.mxu0 0.0
        %994 = vmatpush1.msra.mxu0 0.0
        %995 = vmatprep.subr.mxu0 0.0
        %996 = vmatpush1.msra.mxu0 0.0
        %997 = vmatprep.subr.mxu0 0.0
        %998 = vmatpush1.msra.mxu0 0.0
        %999 = vmatprep.subr.mxu0 0.0
        %1000 = vmatpush1.msra.mxu0 0.0
        %1001 = vmatprep.mubr.f32.mxu0 0.0
        %1002 = vmatmul.mubr.f32.gmra.mrb[0].mxu0 %v935
        %v1003 = vpop.f32.mrb[0].mxu0
        %v1004 = vadd.f32 0.0, %v1003
        %v1005 = vpop.f32.mrb[0].mxu0
        %v1006 = vadd.f32 0.0, %v1005
        %1007 = vdwg.mxu0
        %v1008 = vadd.f32 %v919, %v1004
        %v1009 = vadd.f32 %v920, %v1006
        %1010 = vrot.lane.b32.xlu0 %v487, 96
        %v1011 = vpop.permute.xlu0 %1010
        %1012 = vrot.lane.b32.xlu0 %v488, 96
        %v1013 = vpop.permute.xlu0 %1012
        %vm1014 = vcmp.lt.s32.totalorder %v490, 96
        %v1015 = vsel %vm1014, %v1011, %v1013
        %v1016 = vsel %vm1014, %v1013, %v1011
        %vm1017 = vcmp.lt.s32.totalorder %v490, 224
        %vm1018 = vcmp.lt.s32.totalorder %v491, 224
        %v1019 = vsel %vm1017, %v1015, 0.0
        %v1020 = vsel %vm1018, %v1016, 0.0
        %s1021 = scalar_lea.vmem %s3, 48
        %v1022 = vld [vmem:[%s1021] sm:$0xff]
        %v1024 = vsel %vm250, %v1022, 0
        %1026 = vmatprep.subr.mxu0 %v1020
        %1027 = vmatpush1.msra.mxu0 %v1019
        %1028 = vmatprep.subr.mxu0 0.0
        %1029 = vmatpush1.msra.mxu0 0.0
        %1030 = vmatprep.subr.mxu0 0.0
        %1031 = vmatpush1.msra.mxu0 0.0
        %1032 = vmatprep.subr.mxu0 0.0
        %1033 = vmatpush1.msra.mxu0 0.0
        %1034 = vmatprep.subr.mxu0 0.0
        %1035 = vmatpush1.msra.mxu0 0.0
        %1036 = vmatprep.subr.mxu0 0.0
        %1037 = vmatpush1.msra.mxu0 0.0
        %1038 = vmatprep.subr.mxu0 0.0
        %1039 = vmatpush1.msra.mxu0 0.0
        %1040 = vmatprep.subr.mxu0 0.0
        %1041 = vmatpush1.msra.mxu0 0.0
        %1042 = vmatprep.subr.mxu0 0.0
        %1043 = vmatpush1.msra.mxu0 0.0
        %1044 = vmatprep.subr.mxu0 0.0
        %1045 = vmatpush1.msra.mxu0 0.0
        %1046 = vmatprep.subr.mxu0 0.0
        %1047 = vmatpush1.msra.mxu0 0.0
        %1048 = vmatprep.subr.mxu0 0.0
        %1049 = vmatpush1.msra.mxu0 0.0
        %1050 = vmatprep.subr.mxu0 0.0
        %1051 = vmatpush1.msra.mxu0 0.0
        %1052 = vmatprep.subr.mxu0 0.0
        %1053 = vmatpush1.msra.mxu0 0.0
        %1054 = vmatprep.subr.mxu0 0.0
        %1055 = vmatpush1.msra.mxu0 0.0
        %1056 = vmatprep.subr.mxu0 0.0
        %1057 = vmatpush1.msra.mxu0 0.0
        %1058 = vmatprep.subr.mxu0 0.0
        %1059 = vmatpush1.msra.mxu0 0.0
        %1060 = vmatprep.subr.mxu0 0.0
        %1061 = vmatpush1.msra.mxu0 0.0
        %1062 = vmatprep.subr.mxu0 0.0
        %1063 = vmatpush1.msra.mxu0 0.0
        %1064 = vmatprep.subr.mxu0 0.0
        %1065 = vmatpush1.msra.mxu0 0.0
        %1066 = vmatprep.subr.mxu0 0.0
        %1067 = vmatpush1.msra.mxu0 0.0
        %1068 = vmatprep.subr.mxu0 0.0
        %1069 = vmatpush1.msra.mxu0 0.0
        %1070 = vmatprep.subr.mxu0 0.0
        %1071 = vmatpush1.msra.mxu0 0.0
        %1072 = vmatprep.subr.mxu0 0.0
        %1073 = vmatpush1.msra.mxu0 0.0
        %1074 = vmatprep.subr.mxu0 0.0
        %1075 = vmatpush1.msra.mxu0 0.0
        %1076 = vmatprep.subr.mxu0 0.0
        %1077 = vmatpush1.msra.mxu0 0.0
        %1078 = vmatprep.subr.mxu0 0.0
        %1079 = vmatpush1.msra.mxu0 0.0
        %1080 = vmatprep.subr.mxu0 0.0
        %1081 = vmatpush1.msra.mxu0 0.0
        %1082 = vmatprep.subr.mxu0 0.0
        %1083 = vmatpush1.msra.mxu0 0.0
        %1084 = vmatprep.subr.mxu0 0.0
        %1085 = vmatpush1.msra.mxu0 0.0
        %1086 = vmatprep.subr.mxu0 0.0
        %1087 = vmatpush1.msra.mxu0 0.0
        %1088 = vmatprep.subr.mxu0 0.0
        %1089 = vmatpush1.msra.mxu0 0.0
        %1090 = vmatprep.mubr.f32.mxu0 0.0
        %1091 = vmatmul.mubr.f32.gmra.mrb[0].mxu0 %v1024
        %v1092 = vpop.f32.mrb[0].mxu0
        %v1093 = vadd.f32 0.0, %v1092
        %v1094 = vpop.f32.mrb[0].mxu0
        %v1095 = vadd.f32 0.0, %v1094
        %1096 = vdwg.mxu0
        %v1097 = vadd.f32 %v1008, %v1093
        %v1098 = vadd.f32 %v1009, %v1095
        %1099 = vrot.lane.b32.xlu0 %v487, 80
        %v1100 = vpop.permute.xlu0 %1099
        %1101 = vrot.lane.b32.xlu0 %v488, 80
        %v1102 = vpop.permute.xlu0 %1101
        %vm1103 = vcmp.lt.s32.totalorder %v490, 80
        %v1104 = vsel %vm1103, %v1100, %v1102
        %v1105 = vsel %vm1103, %v1102, %v1100
        %vm1106 = vcmp.lt.s32.totalorder %v490, 208
        %vm1107 = vcmp.lt.s32.totalorder %v491, 208
        %v1108 = vsel %vm1106, %v1104, 0.0
        %v1109 = vsel %vm1107, %v1105, 0.0
        %s1110 = scalar_lea.vmem %s3, 56
        %v1111 = vld [vmem:[%s1110] sm:$0xff]
        %v1113 = vsel %vm250, %v1111, 0
        %1115 = vmatprep.subr.mxu0 %v1109
        %1116 = vmatpush1.msra.mxu0 %v1108
        %1117 = vmatprep.subr.mxu0 0.0
        %1118 = vmatpush1.msra.mxu0 0.0
        %1119 = vmatprep.subr.mxu0 0.0
        %1120 = vmatpush1.msra.mxu0 0.0
        %1121 = vmatprep.subr.mxu0 0.0
        %1122 = vmatpush1.msra.mxu0 0.0
        %1123 = vmatprep.subr.mxu0 0.0
        %1124 = vmatpush1.msra.mxu0 0.0
        %1125 = vmatprep.subr.mxu0 0.0
        %1126 = vmatpush1.msra.mxu0 0.0
        %1127 = vmatprep.subr.mxu0 0.0
        %1128 = vmatpush1.msra.mxu0 0.0
        %1129 = vmatprep.subr.mxu0 0.0
        %1130 = vmatpush1.msra.mxu0 0.0
        %1131 = vmatprep.subr.mxu0 0.0
        %1132 = vmatpush1.msra.mxu0 0.0
        %1133 = vmatprep.subr.mxu0 0.0
        %1134 = vmatpush1.msra.mxu0 0.0
        %1135 = vmatprep.subr.mxu0 0.0
        %1136 = vmatpush1.msra.mxu0 0.0
        %1137 = vmatprep.subr.mxu0 0.0
        %1138 = vmatpush1.msra.mxu0 0.0
        %1139 = vmatprep.subr.mxu0 0.0
        %1140 = vmatpush1.msra.mxu0 0.0
        %1141 = vmatprep.subr.mxu0 0.0
        %1142 = vmatpush1.msra.mxu0 0.0
        %1143 = vmatprep.subr.mxu0 0.0
        %1144 = vmatpush1.msra.mxu0 0.0
        %1145 = vmatprep.subr.mxu0 0.0
        %1146 = vmatpush1.msra.mxu0 0.0
        %1147 = vmatprep.subr.mxu0 0.0
        %1148 = vmatpush1.msra.mxu0 0.0
        %1149 = vmatprep.subr.mxu0 0.0
        %1150 = vmatpush1.msra.mxu0 0.0
        %1151 = vmatprep.subr.mxu0 0.0
        %1152 = vmatpush1.msra.mxu0 0.0
        %1153 = vmatprep.subr.mxu0 0.0
        %1154 = vmatpush1.msra.mxu0 0.0
        %1155 = vmatprep.subr.mxu0 0.0
        %1156 = vmatpush1.msra.mxu0 0.0
        %1157 = vmatprep.subr.mxu0 0.0
        %1158 = vmatpush1.msra.mxu0 0.0
        %1159 = vmatprep.subr.mxu0 0.0
        %1160 = vmatpush1.msra.mxu0 0.0
        %1161 = vmatprep.subr.mxu0 0.0
        %1162 = vmatpush1.msra.mxu0 0.0
        %1163 = vmatprep.subr.mxu0 0.0
        %1164 = vmatpush1.msra.mxu0 0.0
        %1165 = vmatprep.subr.mxu0 0.0
        %1166 = vmatpush1.msra.mxu0 0.0
        %1167 = vmatprep.subr.mxu0 0.0
        %1168 = vmatpush1.msra.mxu0 0.0
        %1169 = vmatprep.subr.mxu0 0.0
        %1170 = vmatpush1.msra.mxu0 0.0
        %1171 = vmatprep.subr.mxu0 0.0
        %1172 = vmatpush1.msra.mxu0 0.0
        %1173 = vmatprep.subr.mxu0 0.0
        %1174 = vmatpush1.msra.mxu0 0.0
        %1175 = vmatprep.subr.mxu0 0.0
        %1176 = vmatpush1.msra.mxu0 0.0
        %1177 = vmatprep.subr.mxu0 0.0
        %1178 = vmatpush1.msra.mxu0 0.0
        %1179 = vmatprep.mubr.f32.mxu0 0.0
        %1180 = vmatmul.mubr.f32.gmra.mrb[0].mxu0 %v1113
        %v1181 = vpop.f32.mrb[0].mxu0
        %v1182 = vadd.f32 0.0, %v1181
        %v1183 = vpop.f32.mrb[0].mxu0
        %v1184 = vadd.f32 0.0, %v1183
        %1185 = vdwg.mxu0
        %v1186 = vadd.f32 %v1097, %v1182
        %v1187 = vadd.f32 %v1098, %v1184
        %vm1188 = vcmp.lt.s32.totalorder %v490, 192
        %vm1189 = vcmp.lt.s32.totalorder %v491, 192
        %v1190 = vsel %vm1188, %v497, 0.0
        %v1191 = vsel %vm1189, %v498, 0.0
        %s1192 = scalar_lea.vmem %s3, 64
        %v1193 = vld [vmem:[%s1192] sm:$0xff]
        %v1195 = vsel %vm250, %v1193, 0
        %1197 = vmatprep.subr.mxu0 %v1191
        %1198 = vmatpush1.msra.mxu0 %v1190
        %1199 = vmatprep.subr.mxu0 0.0
        %1200 = vmatpush1.msra.mxu0 0.0
        %1201 = vmatprep.subr.mxu0 0.0
        %1202 = vmatpush1.msra.mxu0 0.0
        %1203 = vmatprep.subr.mxu0 0.0
        %1204 = vmatpush1.msra.mxu0 0.0
        %1205 = vmatprep.subr.mxu0 0.0
        %1206 = vmatpush1.msra.mxu0 0.0
        %1207 = vmatprep.subr.mxu0 0.0
        %1208 = vmatpush1.msra.mxu0 0.0
        %1209 = vmatprep.subr.mxu0 0.0
        %1210 = vmatpush1.msra.mxu0 0.0
        %1211 = vmatprep.subr.mxu0 0.0
        %1212 = vmatpush1.msra.mxu0 0.0
        %1213 = vmatprep.subr.mxu0 0.0
        %1214 = vmatpush1.msra.mxu0 0.0
        %1215 = vmatprep.subr.mxu0 0.0
        %1216 = vmatpush1.msra.mxu0 0.0
        %1217 = vmatprep.subr.mxu0 0.0
        %1218 = vmatpush1.msra.mxu0 0.0
        %1219 = vmatprep.subr.mxu0 0.0
        %1220 = vmatpush1.msra.mxu0 0.0
        %1221 = vmatprep.subr.mxu0 0.0
        %1222 = vmatpush1.msra.mxu0 0.0
        %1223 = vmatprep.subr.mxu0 0.0
        %1224 = vmatpush1.msra.mxu0 0.0
        %1225 = vmatprep.subr.mxu0 0.0
        %1226 = vmatpush1.msra.mxu0 0.0
        %1227 = vmatprep.subr.mxu0 0.0
        %1228 = vmatpush1.msra.mxu0 0.0
        %1229 = vmatprep.subr.mxu0 0.0
        %1230 = vmatpush1.msra.mxu0 0.0
        %1231 = vmatprep.subr.mxu0 0.0
        %1232 = vmatpush1.msra.mxu0 0.0
        %1233 = vmatprep.subr.mxu0 0.0
        %1234 = vmatpush1.msra.mxu0 0.0
        %1235 = vmatprep.subr.mxu0 0.0
        %1236 = vmatpush1.msra.mxu0 0.0
        %1237 = vmatprep.subr.mxu0 0.0
        %1238 = vmatpush1.msra.mxu0 0.0
        %1239 = vmatprep.subr.mxu0 0.0
        %1240 = vmatpush1.msra.mxu0 0.0
        %1241 = vmatprep.subr.mxu0 0.0
        %1242 = vmatpush1.msra.mxu0 0.0
        %1243 = vmatprep.subr.mxu0 0.0
        %1244 = vmatpush1.msra.mxu0 0.0
        %1245 = vmatprep.subr.mxu0 0.0
        %1246 = vmatpush1.msra.mxu0 0.0
        %1247 = vmatprep.subr.mxu0 0.0
        %1248 = vmatpush1.msra.mxu0 0.0
        %1249 = vmatprep.subr.mxu0 0.0
        %1250 = vmatpush1.msra.mxu0 0.0
        %1251 = vmatprep.subr.mxu0 0.0
        %1252 = vmatpush1.msra.mxu0 0.0
        %1253 = vmatprep.subr.mxu0 0.0
        %1254 = vmatpush1.msra.mxu0 0.0
        %1255 = vmatprep.subr.mxu0 0.0
        %1256 = vmatpush1.msra.mxu0 0.0
        %1257 = vmatprep.subr.mxu0 0.0
        %1258 = vmatpush1.msra.mxu0 0.0
        %1259 = vmatprep.subr.mxu0 0.0
        %1260 = vmatpush1.msra.mxu0 0.0
        %1261 = vmatprep.mubr.f32.mxu0 0.0
        %1262 = vmatmul.mubr.f32.gmra.mrb[0].mxu0 %v1195
        %v1263 = vpop.f32.mrb[0].mxu0
        %v1264 = vadd.f32 0.0, %v1263
        %v1265 = vpop.f32.mrb[0].mxu0
        %v1266 = vadd.f32 0.0, %v1265
        %1267 = vdwg.mxu0
        %v1268 = vadd.f32 %v1186, %v1264
        %v1269 = vadd.f32 %v1187, %v1266
        %1270 = vset.pattern.permute.xlu0 2
        %1271 = vperm.xlu0 %1270, %v243
        %v1272 = vpop.permute.xlu0 %1271
        %v1274 = vadd.f32 %v1268, %v1272
        %v1275 = vadd.f32 %v1269, %v1272
        %v1276 = vadd.f32 %v1274, %v241
        %v1277 = vadd.f32 %v1275, %v242
        %v1278 = vmax.f32 %v1276, 0.0
        %v1279 = vmax.f32 %v1277, 0.0
        %1280 = vst [vmem:[%s240] sm:$0xff] %v1278
        %1281 = vst [vmem:[%s240 + $0x8] sm:$0xff] %v1279
        %s1282 = sand.u32 %s140, 1
        %s1283 = scalar_lea.sflag [#allocation4], %s1282
        %s1284 = sand.u32 %s140, 1
        %s1285 = smul.addr %s1284, 16
        %s1286 = scalar_lea.vmem [#allocation5], %s1285
        // Predicated region
        $region45: #{tpu_custom_call.1} parent=39 // pred_check
          %p1287 = pneg %p150
        $region46: #{tpu_custom_call.1} parent=39 // pred_check_branch
          %1289 = sbr.rel (%p1287) target = $region48
        $region47: #{tpu_custom_call.1} parent=39 // pred_region
          %s1291 = ssub.s32 256, 256
          %1292 = vsyncadd %s1283, %s1291
          %s1293 = smul.addr %s22, 2
          %s1294 = smul.addr %s1293, 128
          %s1295 = scalar_lea.hbm %s5, %s1294
          %s1297 = sshll.u32 %s1286, 4
          %s1298 = int_to_ptr.vmem [resolvable:$true] %s1297
          %1300 = dma.vmem_to_hbm [thread:$0]  %s1298, 256, %s1295, %s1283
        $region48: #{tpu_custom_call.1} parent=39 // pred_fallthru
          _
      $region40: #{tpu_custom_call.1} parent=5 // pred_fallthru
        _
      %p1301 = scmp.le.s32.totalorder 2, %s17
      // Predicated region
      $region49: #{tpu_custom_call.1} parent=5 // pred_check
        %p1302 = pneg %p1301
      $region50: #{tpu_custom_call.1} parent=5 // pred_check_branch
        %1304 = sbr.rel (%p1302) target = $region52
      $region51: #{tpu_custom_call.1} parent=5 // pred_region
        %s1305 = ssub.s32 %s17, 2
        // Predicated region
        $region53: #{tpu_custom_call.1} parent=51 // pred_check
          %p1306 = pneg %p156
        $region54: #{tpu_custom_call.1} parent=51 // pred_check_branch
          %1308 = sbr.rel (%p1306) target = $region56
        $region55: #{tpu_custom_call.1} parent=51 // pred_region
          %s1309 = sand.u32 %s141, 1
          %s1310 = scalar_lea.sflag [#allocation4], %s1309
          %s1311 = sand.u32 %s141, 1
          %s1312 = smul.addr %s1311, 16
          %s1313 = scalar_lea.vmem [#allocation5], %s1312
          %1314 = dma.done %s1310, 256
        $region56: #{tpu_custom_call.1} parent=51 // pred_fallthru
          _
      $region52: #{tpu_custom_call.1} parent=5 // pred_fallthru
        _
    $region6: #{tpu_custom_call.1} parent=1 // loop_footer
      %s21 = sadd.s32 1, %s17
    $region7: #{tpu_custom_call.1} parent=1 // loop_footer_branch
      %16 = sbr.rel target = $region3
    $region8: #{tpu_custom_call.1} parent=1 // loop_exit
      _
    %1315 = vsyncpa [#allocation3], 1
    %s1316 = scalar_lea.sflag [#allocation3], 1
    %1317 = vsyncpa %s1316, 1
    %1318 = vsyncpa [#allocation4], 1
    %s1319 = scalar_lea.sflag [#allocation4], 1
    %1320 = vsyncpa %s1319, 1

</llo_original>
